<compile_context>
chip_gen: v7x
topology: tpu7x:2x2x1
jax: 0.10.0
libtpu: 0.0.40
codegen_flags: <defaults>
</compile_context>

<pallas_src>
import functools

import jax
import jax.numpy as jnp
from jax import lax
from jax.experimental import pallas as pl
from jax.experimental.pallas import tpu as pltpu


def _make_decoder_kernel(n_layers, M, H, horizon, unroll):
    """Builds the kernel body for a fixed layer count / horizon."""
    has_upper = n_layers > 1

    def kernel(*refs):
        if has_upper:
            (ff_ref, y0_ref, h0_ref, c0_ref,
             w0_ref, w_up_ref, b_ref, w_out_ref, b_out_ref, y_all_ref) = refs
        else:
            (ff_ref, y0_ref, h0_ref, c0_ref,
             w0_ref, b_ref, w_out_ref, b_out_ref, y_all_ref) = refs
            w_up_ref = None

        mm_dtype = w0_ref.dtype

        # Weights are tiny here: load once before the time loop and keep them
        # live (loop-invariant) instead of re-reading VMEM every step.
        w0 = w0_ref[...]                                          # (M+d_ff+H, 4H)
        w_up = ([w_up_ref[l] for l in range(n_layers - 1)]
                if has_upper else [])                             # each (2H, 4H)
        biases = [b_ref[l] for l in range(n_layers)]              # each (1, 4H) f32
        w_out = w_out_ref[...]                                    # (H, d_out)
        b_out = b_out_ref[...]                                    # (1, d_out)

        def lstm_cell(gates, c_prev):
            # PyTorch gate order: input, forget, cell(g), output.
            # One full-width sigmoid over the whole (B, 4H) block; only the
            # g slice needs a separate tanh.
            sig = jax.nn.sigmoid(gates)
            i = sig[:, 0 * H:1 * H]
            f = sig[:, 1 * H:2 * H]
            o = sig[:, 3 * H:4 * H]
            g = jnp.tanh(gates[:, 2 * H:3 * H])
            c_new = f * c_prev + i * g
            h_new = o * jnp.tanh(c_new)
            return h_new, c_new

        def step(t, carry):
            y_prev, hs, cs = carry
            f_t = ff_ref[t]                                       # (B, d_ff)

            # ---- layer 0: single fused matmul ------------------------------
            x_in = jnp.concatenate([y_prev, f_t, hs[0]], axis=1)  # (B, M+d_ff+H)
            gates = jnp.dot(x_in.astype(mm_dtype), w0,
                            preferred_element_type=jnp.float32) + biases[0]
            h_new, c_new = lstm_cell(gates, cs[0])
            new_h = [h_new]
            new_c = [c_new]
            x = h_new

            # ---- layers 1..L-1: single fused matmul each -------------------
            for l in range(1, n_layers):
                x_in_l = jnp.concatenate([x, hs[l]], axis=1)      # (B, 2H)
                gates = jnp.dot(x_in_l.astype(mm_dtype), w_up[l - 1],
                                preferred_element_type=jnp.float32) + biases[l]
                h_new, c_new = lstm_cell(gates, cs[l])
                new_h.append(h_new)
                new_c.append(c_new)
                x = h_new

            # ---- linear output head ---------------------------------------
            y = jnp.dot(x.astype(mm_dtype), w_out,
                        preferred_element_type=jnp.float32) + b_out
            # VMEM-only store; whole slab is written back to HBM once at the
            # end of the kernel.
            y_all_ref[t] = y

            # autoregressive feedback: first M columns feed the next step.
            return (y[:, :M], tuple(new_h), tuple(new_c))

        h_init = tuple(h0_ref[l] for l in range(n_layers))
        c_init = tuple(c0_ref[l] for l in range(n_layers))
        carry0 = (y0_ref[...], h_init, c_init)
        lax.fori_loop(0, horizon, step, carry0, unroll=unroll)

    return kernel


def decoder_recurrent_pallas(params, inp_y, h0, c0, future_features, horizon_span,
                             M, Q, d_hidden, n_layers,
                             matmul_dtype=jnp.float32):
    """Pallas wrapper mimicking Decoder_recurrent.forward (teacher_forcing=False).

    matmul_dtype: keep jnp.float32 for bit-tight parity with the f32 reference;
    jnp.bfloat16 is the recommended setting for v6e/v7x production runs (MXU is
    bf16-native; gate math / c-state stay in f32 regardless).
    """
    B = future_features.shape[0]
    d_ff = future_features.shape[2]
    d_out = M * Q
    H = d_hidden

    # time-major layout so the kernel indexes one (B, d_ff) row per step
    ff_tm = jnp.transpose(future_features, (1, 0, 2)).astype(jnp.float32)  # (T,B,d_ff)
    y0 = inp_y[:, 0, :].astype(jnp.float32)                                # (B, M)

    # ---- host-side weight fusion --------------------------------------
    # layer 0: gates = concat([y_prev, f_t, h]) @ [w_ih.T ; w_hh.T]
    w0 = jnp.concatenate([params['w_ih'][0].T, params['w_hh'][0].T],
                         axis=0).astype(matmul_dtype)            # (M+d_ff+H, 4H)
    # fused b_ih + b_hh per layer
    b_all = jnp.stack([(params['b_ih'][l] + params['b_hh'][l])[None, :]
                       for l in range(n_layers)], axis=0).astype(jnp.float32)  # (L,1,4H)

    inputs = [ff_tm, y0, h0.astype(jnp.float32), c0.astype(jnp.float32), w0]
    if n_layers > 1:
        w_up = jnp.stack(
            [jnp.concatenate([params['w_ih'][l].T, params['w_hh'][l].T], axis=0)
             for l in range(1, n_layers)], axis=0).astype(matmul_dtype)   # (L-1,2H,4H)
        inputs.append(w_up)
    inputs.append(b_all)

    w_out_T = params['w_out'].T.astype(matmul_dtype)             # (H, d_out)
    b_out = params['b_out'][None, :].astype(jnp.float32)         # (1, d_out)
    inputs += [w_out_T, b_out]

    # fully unroll short horizons (LLO scheduler visibility); partial for long
    unroll = True if horizon_span <= 64 else 8

    kernel = _make_decoder_kernel(n_layers, M, H, horizon_span, unroll)

    # No grid: everything (a few KiB total) sits in VMEM for the whole kernel,
    # weights are single-buffered by construction, output is one dense slab.
    # TODO(synk): for very long horizons / large d_hidden, time-chunk with a
    # grid and re-derive chunk sizes for v7x's 64 MiB VMEM.
    vmem_spec = lambda: pl.BlockSpec(memory_space=pltpu.MemorySpace.VMEM)

    y_tm = pl.pallas_call(
        kernel,
        out_shape=jax.ShapeDtypeStruct((horizon_span, B, d_out), jnp.float32),
        in_specs=[vmem_spec() for _ in inputs],
        out_specs=vmem_spec(),
    )(*inputs)

    all_outputs = jnp.transpose(y_tm, (1, 0, 2))                 # (B, T, d_out)
    return all_outputs.reshape(B, horizon_span, M, Q)


# ---------------------------------------------------------------------------
# Pure-JAX reference of the PyTorch forward (teacher_forcing=False), for check.
# ---------------------------------------------------------------------------
def decoder_recurrent_ref(params, inp_y, h0, c0, future_features, horizon_span,
                          M, Q, d_hidden, n_layers):
    B = future_features.shape[0]
    h = [h0[l] for l in range(n_layers)]
    c = [c0[l] for l in range(n_layers)]
    y_prev = inp_y[:, 0, :]
    outs = []
    for t in range(horizon_span):
        x = jnp.concatenate([y_prev, future_features[:, t, :]], axis=1)
        for l in range(n_layers):
            gates = (x @ params['w_ih'][l].T + params['b_ih'][l]
                     + h[l] @ params['w_hh'][l].T + params['b_hh'][l])
            H = d_hidden
            i = jax.nn.sigmoid(gates[:, 0 * H:1 * H])
            f = jax.nn.sigmoid(gates[:, 1 * H:2 * H])
            g = jnp.tanh(gates[:, 2 * H:3 * H])
            o = jax.nn.sigmoid(gates[:, 3 * H:4 * H])
            c[l] = f * c[l] + i * g
            h[l] = o * jnp.tanh(c[l])
            x = h[l]
        y = x @ params['w_out'].T + params['b_out']
        outs.append(y)
        y_prev = y[:, :M]
    all_outputs = jnp.stack(outs, axis=1)
    return all_outputs.reshape(B, horizon_span, M, Q)


if __name__ == "__main__":
    # ---- module hyperparameters (small, consistent with __init__) -----
    B = 2
    M = 2
    Q = 3
    d_future_features = 4
    d_hidden = 32
    n_layers = 2
    horizon_span = 8
    d_input = d_future_features + M
    d_output = M * Q

    key = jax.random.PRNGKey(0)
    ks = iter(jax.random.split(key, 64))

    k_lstm = 1.0 / jnp.sqrt(d_hidden)
    w_ih, w_hh, b_ih, b_hh = [], [], [], []
    for l in range(n_layers):
        in_l = d_input if l == 0 else d_hidden
        w_ih.append(jax.random.uniform(next(ks), (4 * d_hidden, in_l),
                                       minval=-k_lstm, maxval=k_lstm, dtype=jnp.float32))
        w_hh.append(jax.random.uniform(next(ks), (4 * d_hidden, d_hidden),
                                       minval=-k_lstm, maxval=k_lstm, dtype=jnp.float32))
        b_ih.append(jax.random.uniform(next(ks), (4 * d_hidden,),
                                       minval=-k_lstm, maxval=k_lstm, dtype=jnp.float32))
        b_hh.append(jax.random.uniform(next(ks), (4 * d_hidden,),
                                       minval=-k_lstm, maxval=k_lstm, dtype=jnp.float32))
    k_lin = 1.0 / jnp.sqrt(d_hidden)
    params = {
        'w_ih': w_ih, 'w_hh': w_hh, 'b_ih': b_ih, 'b_hh': b_hh,
        'w_out': jax.random.uniform(next(ks), (d_output, d_hidden),
                                    minval=-k_lin, maxval=k_lin, dtype=jnp.float32),
        'b_out': jax.random.uniform(next(ks), (d_output,),
                                    minval=-k_lin, maxval=k_lin, dtype=jnp.float32),
    }

    # ---- forward() inputs ---------------------------------------------
    future_features = jax.random.normal(next(ks), (B, horizon_span, d_future_features),
                                        dtype=jnp.float32)
    inp_y = jax.random.normal(next(ks), (B, 1, M), dtype=jnp.float32)
    h0 = jax.random.normal(next(ks), (n_layers, B, d_hidden), dtype=jnp.float32)
    c0 = jax.random.normal(next(ks), (n_layers, B, d_hidden), dtype=jnp.float32)
    # Y_teacher unused: teacher_forcing=False (stochastic host-side branch).

    run = functools.partial(decoder_recurrent_pallas, M=M, Q=Q,
                            d_hidden=d_hidden, n_layers=n_layers)
    out = run(params, inp_y, h0, c0, future_features, horizon_span)
    out = jax.block_until_ready(out)

    ref = decoder_recurrent_ref(params, inp_y, h0, c0, future_features,
                                horizon_span, M, Q, d_hidden, n_layers)
    assert out.shape == (B, horizon_span, M, Q)
    assert jnp.allclose(out, ref, atol=1e-4, rtol=1e-4), \
        f"max abs err {jnp.max(jnp.abs(out - ref))}"
    print("KERNEL_OK")
</pallas_src>

<mosaic_0001>
module attributes {stable_mosaic.version = 11 : i64} {
  func.func @kernel(%arg0: memref<8x2x4xf32, #tpu.memory_space<vmem>>, %arg1: memref<2x2xf32, #tpu.memory_space<vmem>>, %arg2: memref<2x2x32xf32, #tpu.memory_space<vmem>>, %arg3: memref<2x2x32xf32, #tpu.memory_space<vmem>>, %arg4: memref<38x128xf32, #tpu.memory_space<vmem>>, %arg5: memref<1x64x128xf32, #tpu.memory_space<vmem>>, %arg6: memref<2x1x128xf32, #tpu.memory_space<vmem>>, %arg7: memref<32x6xf32, #tpu.memory_space<vmem>>, %arg8: memref<1x6xf32, #tpu.memory_space<vmem>>, %arg9: memref<8x2x6xf32, #tpu.memory_space<vmem>>) attributes {dimension_semantics = [], scalar_prefetch = 0 : i64, scratch_operands = 0 : i64, tpu.core_type = #tpu.core_type<tc>} {
    %c0 = arith.constant 0 : index
    %c0_0 = arith.constant 0 : index
    %0 = vector.load %arg4[%c0, %c0_0] : memref<38x128xf32, #tpu.memory_space<vmem>>, vector<38x128xf32>
    %c0_1 = arith.constant 0 : index
    %c0_2 = arith.constant 0 : index
    %c0_3 = arith.constant 0 : index
    %1 = vector.load %arg5[%c0_1, %c0_2, %c0_3] : memref<1x64x128xf32, #tpu.memory_space<vmem>>, vector<1x64x128xf32>
    %2 = vector.shape_cast %1 : vector<1x64x128xf32> to vector<64x128xf32>
    %c0_4 = arith.constant 0 : index
    %c0_5 = arith.constant 0 : index
    %c0_6 = arith.constant 0 : index
    %3 = vector.load %arg6[%c0_4, %c0_5, %c0_6] : memref<2x1x128xf32, #tpu.memory_space<vmem>>, vector<1x1x128xf32>
    %4 = vector.shape_cast %3 : vector<1x1x128xf32> to vector<1x128xf32>
    %c1 = arith.constant 1 : index
    %c0_7 = arith.constant 0 : index
    %c0_8 = arith.constant 0 : index
    %5 = vector.load %arg6[%c1, %c0_7, %c0_8] : memref<2x1x128xf32, #tpu.memory_space<vmem>>, vector<1x1x128xf32>
    %6 = vector.shape_cast %5 : vector<1x1x128xf32> to vector<1x128xf32>
    %c0_9 = arith.constant 0 : index
    %c0_10 = arith.constant 0 : index
    %7 = vector.load %arg7[%c0_9, %c0_10] : memref<32x6xf32, #tpu.memory_space<vmem>>, vector<32x6xf32>
    %c0_11 = arith.constant 0 : index
    %c0_12 = arith.constant 0 : index
    %8 = vector.load %arg8[%c0_11, %c0_12] : memref<1x6xf32, #tpu.memory_space<vmem>>, vector<1x6xf32>
    %c0_13 = arith.constant 0 : index
    %c0_14 = arith.constant 0 : index
    %c0_15 = arith.constant 0 : index
    %9 = vector.load %arg2[%c0_13, %c0_14, %c0_15] : memref<2x2x32xf32, #tpu.memory_space<vmem>>, vector<1x2x32xf32>
    %10 = vector.shape_cast %9 : vector<1x2x32xf32> to vector<2x32xf32>
    %c1_16 = arith.constant 1 : index
    %c0_17 = arith.constant 0 : index
    %c0_18 = arith.constant 0 : index
    %11 = vector.load %arg2[%c1_16, %c0_17, %c0_18] : memref<2x2x32xf32, #tpu.memory_space<vmem>>, vector<1x2x32xf32>
    %12 = vector.shape_cast %11 : vector<1x2x32xf32> to vector<2x32xf32>
    %c0_19 = arith.constant 0 : index
    %c0_20 = arith.constant 0 : index
    %c0_21 = arith.constant 0 : index
    %13 = vector.load %arg3[%c0_19, %c0_20, %c0_21] : memref<2x2x32xf32, #tpu.memory_space<vmem>>, vector<1x2x32xf32>
    %14 = vector.shape_cast %13 : vector<1x2x32xf32> to vector<2x32xf32>
    %c1_22 = arith.constant 1 : index
    %c0_23 = arith.constant 0 : index
    %c0_24 = arith.constant 0 : index
    %15 = vector.load %arg3[%c1_22, %c0_23, %c0_24] : memref<2x2x32xf32, #tpu.memory_space<vmem>>, vector<1x2x32xf32>
    %16 = vector.shape_cast %15 : vector<1x2x32xf32> to vector<2x32xf32>
    %c0_25 = arith.constant 0 : index
    %c0_26 = arith.constant 0 : index
    %17 = vector.load %arg1[%c0_25, %c0_26] : memref<2x2xf32, #tpu.memory_space<vmem>>, vector<2x2xf32>
    %c0_i32 = arith.constant 0 : i32
    %18 = arith.index_cast %c0_i32 : i32 to index
    %c0_27 = arith.constant 0 : index
    %c0_28 = arith.constant 0 : index
    %19 = vector.load %arg0[%18, %c0_27, %c0_28] : memref<8x2x4xf32, #tpu.memory_space<vmem>>, vector<1x2x4xf32>
    %20 = vector.shape_cast %19 : vector<1x2x4xf32> to vector<2x4xf32>
    %21 = tpu.concatenate %17, %20, %10 in 1 : vector<2x2xf32>, vector<2x4xf32>, vector<2x32xf32> -> vector<2x38xf32>
    %cst = arith.constant dense<0.000000e+00> : vector<2x128xf32>
    %22 = tpu.matmul %21, %0, %cst {dimension_numbers = #tpu.dot_dimension_numbers<[1], [0], [0], [1], [0, 0, 1, 1], [], []>} : vector<2x38xf32>, vector<38x128xf32>, vector<2x128xf32> -> vector<2x128xf32>
    %23 = vector.broadcast %4 : vector<1x128xf32> to vector<2x128xf32>
    %24 = arith.addf %22, %23 : vector<2x128xf32>
    %25 = arith.negf %24 : vector<2x128xf32>
    %26 = math.exp %25 : vector<2x128xf32>
    %cst_29 = arith.constant 1.000000e+00 : f32
    %27 = vector.broadcast %cst_29 : f32 to vector<2x128xf32>
    %28 = arith.addf %27, %26 : vector<2x128xf32>
    %29 = arith.divf %27, %28 : vector<2x128xf32>
    %30 = vector.extract_strided_slice %29 {offsets = [0, 0], sizes = [2, 32], strides = [1, 1]} : vector<2x128xf32> to vector<2x32xf32>
    %31 = vector.extract_strided_slice %29 {offsets = [0, 32], sizes = [2, 32], strides = [1, 1]} : vector<2x128xf32> to vector<2x32xf32>
    %32 = vector.extract_strided_slice %29 {offsets = [0, 96], sizes = [2, 32], strides = [1, 1]} : vector<2x128xf32> to vector<2x32xf32>
    %33 = vector.extract_strided_slice %24 {offsets = [0, 64], sizes = [2, 32], strides = [1, 1]} : vector<2x128xf32> to vector<2x32xf32>
    %34 = math.tanh %33 : vector<2x32xf32>
    %35 = arith.mulf %31, %14 : vector<2x32xf32>
    %36 = arith.mulf %30, %34 : vector<2x32xf32>
    %37 = arith.addf %35, %36 : vector<2x32xf32>
    %38 = math.tanh %37 : vector<2x32xf32>
    %39 = arith.mulf %32, %38 : vector<2x32xf32>
    %40 = tpu.concatenate %39, %12 in 1 : vector<2x32xf32>, vector<2x32xf32> -> vector<2x64xf32>
    %cst_30 = arith.constant dense<0.000000e+00> : vector<2x128xf32>
    %41 = tpu.matmul %40, %2, %cst_30 {dimension_numbers = #tpu.dot_dimension_numbers<[1], [0], [0], [1], [0, 0, 1, 1], [], []>} : vector<2x64xf32>, vector<64x128xf32>, vector<2x128xf32> -> vector<2x128xf32>
    %42 = vector.broadcast %6 : vector<1x128xf32> to vector<2x128xf32>
    %43 = arith.addf %41, %42 : vector<2x128xf32>
    %44 = arith.negf %43 : vector<2x128xf32>
    %45 = math.exp %44 : vector<2x128xf32>
    %cst_31 = arith.constant 1.000000e+00 : f32
    %46 = vector.broadcast %cst_31 : f32 to vector<2x128xf32>
    %47 = arith.addf %46, %45 : vector<2x128xf32>
    %48 = arith.divf %46, %47 : vector<2x128xf32>
    %49 = vector.extract_strided_slice %48 {offsets = [0, 0], sizes = [2, 32], strides = [1, 1]} : vector<2x128xf32> to vector<2x32xf32>
    %50 = vector.extract_strided_slice %48 {offsets = [0, 32], sizes = [2, 32], strides = [1, 1]} : vector<2x128xf32> to vector<2x32xf32>
    %51 = vector.extract_strided_slice %48 {offsets = [0, 96], sizes = [2, 32], strides = [1, 1]} : vector<2x128xf32> to vector<2x32xf32>
    %52 = vector.extract_strided_slice %43 {offsets = [0, 64], sizes = [2, 32], strides = [1, 1]} : vector<2x128xf32> to vector<2x32xf32>
    %53 = math.tanh %52 : vector<2x32xf32>
    %54 = arith.mulf %50, %16 : vector<2x32xf32>
    %55 = arith.mulf %49, %53 : vector<2x32xf32>
    %56 = arith.addf %54, %55 : vector<2x32xf32>
    %57 = math.tanh %56 : vector<2x32xf32>
    %58 = arith.mulf %51, %57 : vector<2x32xf32>
    %cst_32 = arith.constant dense<0.000000e+00> : vector<2x6xf32>
    %59 = tpu.matmul %58, %7, %cst_32 {dimension_numbers = #tpu.dot_dimension_numbers<[1], [0], [0], [1], [0, 0, 1, 1], [], []>} : vector<2x32xf32>, vector<32x6xf32>, vector<2x6xf32> -> vector<2x6xf32>
    %60 = vector.broadcast %8 : vector<1x6xf32> to vector<2x6xf32>
    %61 = arith.addf %59, %60 : vector<2x6xf32>
    %62 = arith.index_cast %c0_i32 : i32 to index
    %c0_33 = arith.constant 0 : index
    %c0_34 = arith.constant 0 : index
    %63 = vector.load %arg9[%62, %c0_33, %c0_34] : memref<8x2x6xf32, #tpu.memory_space<vmem>>, vector<1x2x6xf32>
    %64 = vector.shape_cast %63 : vector<1x2x6xf32> to vector<2x6xf32>
    %65 = vector.shape_cast %61 : vector<2x6xf32> to vector<1x2x6xf32>
    tpu.vector_store %arg9[%62, %c0_33, %c0_34], %65 {strides = array<i32>} : memref<8x2x6xf32, #tpu.memory_space<vmem>>, vector<1x2x6xf32>,
    %66 = vector.extract_strided_slice %61 {offsets = [0, 0], sizes = [2, 2], strides = [1, 1]} : vector<2x6xf32> to vector<2x2xf32>
    %c1_i32 = arith.constant 1 : i32
    %67 = arith.index_cast %c1_i32 : i32 to index
    %c0_35 = arith.constant 0 : index
    %c0_36 = arith.constant 0 : index
    %68 = vector.load %arg0[%67, %c0_35, %c0_36] : memref<8x2x4xf32, #tpu.memory_space<vmem>>, vector<1x2x4xf32>
    %69 = vector.shape_cast %68 : vector<1x2x4xf32> to vector<2x4xf32>
    %70 = tpu.concatenate %66, %69, %39 in 1 : vector<2x2xf32>, vector<2x4xf32>, vector<2x32xf32> -> vector<2x38xf32>
    %cst_37 = arith.constant dense<0.000000e+00> : vector<2x128xf32>
    %71 = tpu.matmul %70, %0, %cst_37 {dimension_numbers = #tpu.dot_dimension_numbers<[1], [0], [0], [1], [0, 0, 1, 1], [], []>} : vector<2x38xf32>, vector<38x128xf32>, vector<2x128xf32> -> vector<2x128xf32>
    %72 = vector.broadcast %4 : vector<1x128xf32> to vector<2x128xf32>
    %73 = arith.addf %71, %72 : vector<2x128xf32>
    %74 = arith.negf %73 : vector<2x128xf32>
    %75 = math.exp %74 : vector<2x128xf32>
    %cst_38 = arith.constant 1.000000e+00 : f32
    %76 = vector.broadcast %cst_38 : f32 to vector<2x128xf32>
    %77 = arith.addf %76, %75 : vector<2x128xf32>
    %78 = arith.divf %76, %77 : vector<2x128xf32>
    %79 = vector.extract_strided_slice %78 {offsets = [0, 0], sizes = [2, 32], strides = [1, 1]} : vector<2x128xf32> to vector<2x32xf32>
    %80 = vector.extract_strided_slice %78 {offsets = [0, 32], sizes = [2, 32], strides = [1, 1]} : vector<2x128xf32> to vector<2x32xf32>
    %81 = vector.extract_strided_slice %78 {offsets = [0, 96], sizes = [2, 32], strides = [1, 1]} : vector<2x128xf32> to vector<2x32xf32>
    %82 = vector.extract_strided_slice %73 {offsets = [0, 64], sizes = [2, 32], strides = [1, 1]} : vector<2x128xf32> to vector<2x32xf32>
    %83 = math.tanh %82 : vector<2x32xf32>
    %84 = arith.mulf %80, %37 : vector<2x32xf32>
    %85 = arith.mulf %79, %83 : vector<2x32xf32>
    %86 = arith.addf %84, %85 : vector<2x32xf32>
    %87 = math.tanh %86 : vector<2x32xf32>
    %88 = arith.mulf %81, %87 : vector<2x32xf32>
    %89 = tpu.concatenate %88, %58 in 1 : vector<2x32xf32>, vector<2x32xf32> -> vector<2x64xf32>
    %cst_39 = arith.constant dense<0.000000e+00> : vector<2x128xf32>
    %90 = tpu.matmul %89, %2, %cst_39 {dimension_numbers = #tpu.dot_dimension_numbers<[1], [0], [0], [1], [0, 0, 1, 1], [], []>} : vector<2x64xf32>, vector<64x128xf32>, vector<2x128xf32> -> vector<2x128xf32>
    %91 = vector.broadcast %6 : vector<1x128xf32> to vector<2x128xf32>
    %92 = arith.addf %90, %91 : vector<2x128xf32>
    %93 = arith.negf %92 : vector<2x128xf32>
    %94 = math.exp %93 : vector<2x128xf32>
    %cst_40 = arith.constant 1.000000e+00 : f32
    %95 = vector.broadcast %cst_40 : f32 to vector<2x128xf32>
    %96 = arith.addf %95, %94 : vector<2x128xf32>
    %97 = arith.divf %95, %96 : vector<2x128xf32>
    %98 = vector.extract_strided_slice %97 {offsets = [0, 0], sizes = [2, 32], strides = [1, 1]} : vector<2x128xf32> to vector<2x32xf32>
    %99 = vector.extract_strided_slice %97 {offsets = [0, 32], sizes = [2, 32], strides = [1, 1]} : vector<2x128xf32> to vector<2x32xf32>
    %100 = vector.extract_strided_slice %97 {offsets = [0, 96], sizes = [2, 32], strides = [1, 1]} : vector<2x128xf32> to vector<2x32xf32>
    %101 = vector.extract_strided_slice %92 {offsets = [0, 64], sizes = [2, 32], strides = [1, 1]} : vector<2x128xf32> to vector<2x32xf32>
    %102 = math.tanh %101 : vector<2x32xf32>
    %103 = arith.mulf %99, %56 : vector<2x32xf32>
    %104 = arith.mulf %98, %102 : vector<2x32xf32>
    %105 = arith.addf %103, %104 : vector<2x32xf32>
    %106 = math.tanh %105 : vector<2x32xf32>
    %107 = arith.mulf %100, %106 : vector<2x32xf32>
    %cst_41 = arith.constant dense<0.000000e+00> : vector<2x6xf32>
    %108 = tpu.matmul %107, %7, %cst_41 {dimension_numbers = #tpu.dot_dimension_numbers<[1], [0], [0], [1], [0, 0, 1, 1], [], []>} : vector<2x32xf32>, vector<32x6xf32>, vector<2x6xf32> -> vector<2x6xf32>
    %109 = vector.broadcast %8 : vector<1x6xf32> to vector<2x6xf32>
    %110 = arith.addf %108, %109 : vector<2x6xf32>
    %111 = arith.index_cast %c1_i32 : i32 to index
    %c0_42 = arith.constant 0 : index
    %c0_43 = arith.constant 0 : index
    %112 = vector.load %arg9[%111, %c0_42, %c0_43] : memref<8x2x6xf32, #tpu.memory_space<vmem>>, vector<1x2x6xf32>
    %113 = vector.shape_cast %112 : vector<1x2x6xf32> to vector<2x6xf32>
    %114 = vector.shape_cast %110 : vector<2x6xf32> to vector<1x2x6xf32>
    tpu.vector_store %arg9[%111, %c0_42, %c0_43], %114 {strides = array<i32>} : memref<8x2x6xf32, #tpu.memory_space<vmem>>, vector<1x2x6xf32>,
    %115 = vector.extract_strided_slice %110 {offsets = [0, 0], sizes = [2, 2], strides = [1, 1]} : vector<2x6xf32> to vector<2x2xf32>
    %c2_i32 = arith.constant 2 : i32
    %116 = arith.index_cast %c2_i32 : i32 to index
    %c0_44 = arith.constant 0 : index
    %c0_45 = arith.constant 0 : index
    %117 = vector.load %arg0[%116, %c0_44, %c0_45] : memref<8x2x4xf32, #tpu.memory_space<vmem>>, vector<1x2x4xf32>
    %118 = vector.shape_cast %117 : vector<1x2x4xf32> to vector<2x4xf32>
    %119 = tpu.concatenate %115, %118, %88 in 1 : vector<2x2xf32>, vector<2x4xf32>, vector<2x32xf32> -> vector<2x38xf32>
    %cst_46 = arith.constant dense<0.000000e+00> : vector<2x128xf32>
    %120 = tpu.matmul %119, %0, %cst_46 {dimension_numbers = #tpu.dot_dimension_numbers<[1], [0], [0], [1], [0, 0, 1, 1], [], []>} : vector<2x38xf32>, vector<38x128xf32>, vector<2x128xf32> -> vector<2x128xf32>
    %121 = vector.broadcast %4 : vector<1x128xf32> to vector<2x128xf32>
    %122 = arith.addf %120, %121 : vector<2x128xf32>
    %123 = arith.negf %122 : vector<2x128xf32>
    %124 = math.exp %123 : vector<2x128xf32>
    %cst_47 = arith.constant 1.000000e+00 : f32
    %125 = vector.broadcast %cst_47 : f32 to vector<2x128xf32>
    %126 = arith.addf %125, %124 : vector<2x128xf32>
    %127 = arith.divf %125, %126 : vector<2x128xf32>
    %128 = vector.extract_strided_slice %127 {offsets = [0, 0], sizes = [2, 32], strides = [1, 1]} : vector<2x128xf32> to vector<2x32xf32>
    %129 = vector.extract_strided_slice %127 {offsets = [0, 32], sizes = [2, 32], strides = [1, 1]} : vector<2x128xf32> to vector<2x32xf32>
    %130 = vector.extract_strided_slice %127 {offsets = [0, 96], sizes = [2, 32], strides = [1, 1]} : vector<2x128xf32> to vector<2x32xf32>
    %131 = vector.extract_strided_slice %122 {offsets = [0, 64], sizes = [2, 32], strides = [1, 1]} : vector<2x128xf32> to vector<2x32xf32>
    %132 = math.tanh %131 : vector<2x32xf32>
    %133 = arith.mulf %129, %86 : vector<2x32xf32>
    %134 = arith.mulf %128, %132 : vector<2x32xf32>
    %135 = arith.addf %133, %134 : vector<2x32xf32>
    %136 = math.tanh %135 : vector<2x32xf32>
    %137 = arith.mulf %130, %136 : vector<2x32xf32>
    %138 = tpu.concatenate %137, %107 in 1 : vector<2x32xf32>, vector<2x32xf32> -> vector<2x64xf32>
    %cst_48 = arith.constant dense<0.000000e+00> : vector<2x128xf32>
    %139 = tpu.matmul %138, %2, %cst_48 {dimension_numbers = #tpu.dot_dimension_numbers<[1], [0], [0], [1], [0, 0, 1, 1], [], []>} : vector<2x64xf32>, vector<64x128xf32>, vector<2x128xf32> -> vector<2x128xf32>
    %140 = vector.broadcast %6 : vector<1x128xf32> to vector<2x128xf32>
    %141 = arith.addf %139, %140 : vector<2x128xf32>
    %142 = arith.negf %141 : vector<2x128xf32>
    %143 = math.exp %142 : vector<2x128xf32>
    %cst_49 = arith.constant 1.000000e+00 : f32
    %144 = vector.broadcast %cst_49 : f32 to vector<2x128xf32>
    %145 = arith.addf %144, %143 : vector<2x128xf32>
    %146 = arith.divf %144, %145 : vector<2x128xf32>
    %147 = vector.extract_strided_slice %146 {offsets = [0, 0], sizes = [2, 32], strides = [1, 1]} : vector<2x128xf32> to vector<2x32xf32>
    %148 = vector.extract_strided_slice %146 {offsets = [0, 32], sizes = [2, 32], strides = [1, 1]} : vector<2x128xf32> to vector<2x32xf32>
    %149 = vector.extract_strided_slice %146 {offsets = [0, 96], sizes = [2, 32], strides = [1, 1]} : vector<2x128xf32> to vector<2x32xf32>
    %150 = vector.extract_strided_slice %141 {offsets = [0, 64], sizes = [2, 32], strides = [1, 1]} : vector<2x128xf32> to vector<2x32xf32>
    %151 = math.tanh %150 : vector<2x32xf32>
    %152 = arith.mulf %148, %105 : vector<2x32xf32>
    %153 = arith.mulf %147, %151 : vector<2x32xf32>
    %154 = arith.addf %152, %153 : vector<2x32xf32>
    %155 = math.tanh %154 : vector<2x32xf32>
    %156 = arith.mulf %149, %155 : vector<2x32xf32>
    %cst_50 = arith.constant dense<0.000000e+00> : vector<2x6xf32>
    %157 = tpu.matmul %156, %7, %cst_50 {dimension_numbers = #tpu.dot_dimension_numbers<[1], [0], [0], [1], [0, 0, 1, 1], [], []>} : vector<2x32xf32>, vector<32x6xf32>, vector<2x6xf32> -> vector<2x6xf32>
    %158 = vector.broadcast %8 : vector<1x6xf32> to vector<2x6xf32>
    %159 = arith.addf %157, %158 : vector<2x6xf32>
    %160 = arith.index_cast %c2_i32 : i32 to index
    %c0_51 = arith.constant 0 : index
    %c0_52 = arith.constant 0 : index
    %161 = vector.load %arg9[%160, %c0_51, %c0_52] : memref<8x2x6xf32, #tpu.memory_space<vmem>>, vector<1x2x6xf32>
    %162 = vector.shape_cast %161 : vector<1x2x6xf32> to vector<2x6xf32>
    %163 = vector.shape_cast %159 : vector<2x6xf32> to vector<1x2x6xf32>
    tpu.vector_store %arg9[%160, %c0_51, %c0_52], %163 {strides = array<i32>} : memref<8x2x6xf32, #tpu.memory_space<vmem>>, vector<1x2x6xf32>,
    %164 = vector.extract_strided_slice %159 {offsets = [0, 0], sizes = [2, 2], strides = [1, 1]} : vector<2x6xf32> to vector<2x2xf32>
    %c3_i32 = arith.constant 3 : i32
    %165 = arith.index_cast %c3_i32 : i32 to index
    %c0_53 = arith.constant 0 : index
    %c0_54 = arith.constant 0 : index
    %166 = vector.load %arg0[%165, %c0_53, %c0_54] : memref<8x2x4xf32, #tpu.memory_space<vmem>>, vector<1x2x4xf32>
    %167 = vector.shape_cast %166 : vector<1x2x4xf32> to vector<2x4xf32>
    %168 = tpu.concatenate %164, %167, %137 in 1 : vector<2x2xf32>, vector<2x4xf32>, vector<2x32xf32> -> vector<2x38xf32>
    %cst_55 = arith.constant dense<0.000000e+00> : vector<2x128xf32>
    %169 = tpu.matmul %168, %0, %cst_55 {dimension_numbers = #tpu.dot_dimension_numbers<[1], [0], [0], [1], [0, 0, 1, 1], [], []>} : vector<2x38xf32>, vector<38x128xf32>, vector<2x128xf32> -> vector<2x128xf32>
    %170 = vector.broadcast %4 : vector<1x128xf32> to vector<2x128xf32>
    %171 = arith.addf %169, %170 : vector<2x128xf32>
    %172 = arith.negf %171 : vector<2x128xf32>
    %173 = math.exp %172 : vector<2x128xf32>
    %cst_56 = arith.constant 1.000000e+00 : f32
    %174 = vector.broadcast %cst_56 : f32 to vector<2x128xf32>
    %175 = arith.addf %174, %173 : vector<2x128xf32>
    %176 = arith.divf %174, %175 : vector<2x128xf32>
    %177 = vector.extract_strided_slice %176 {offsets = [0, 0], sizes = [2, 32], strides = [1, 1]} : vector<2x128xf32> to vector<2x32xf32>
    %178 = vector.extract_strided_slice %176 {offsets = [0, 32], sizes = [2, 32], strides = [1, 1]} : vector<2x128xf32> to vector<2x32xf32>
    %179 = vector.extract_strided_slice %176 {offsets = [0, 96], sizes = [2, 32], strides = [1, 1]} : vector<2x128xf32> to vector<2x32xf32>
    %180 = vector.extract_strided_slice %171 {offsets = [0, 64], sizes = [2, 32], strides = [1, 1]} : vector<2x128xf32> to vector<2x32xf32>
    %181 = math.tanh %180 : vector<2x32xf32>
    %182 = arith.mulf %178, %135 : vector<2x32xf32>
    %183 = arith.mulf %177, %181 : vector<2x32xf32>
    %184 = arith.addf %182, %183 : vector<2x32xf32>
    %185 = math.tanh %184 : vector<2x32xf32>
    %186 = arith.mulf %179, %185 : vector<2x32xf32>
    %187 = tpu.concatenate %186, %156 in 1 : vector<2x32xf32>, vector<2x32xf32> -> vector<2x64xf32>
    %cst_57 = arith.constant dense<0.000000e+00> : vector<2x128xf32>
    %188 = tpu.matmul %187, %2, %cst_57 {dimension_numbers = #tpu.dot_dimension_numbers<[1], [0], [0], [1], [0, 0, 1, 1], [], []>} : vector<2x64xf32>, vector<64x128xf32>, vector<2x128xf32> -> vector<2x128xf32>
    %189 = vector.broadcast %6 : vector<1x128xf32> to vector<2x128xf32>
    %190 = arith.addf %188, %189 : vector<2x128xf32>
    %191 = arith.negf %190 : vector<2x128xf32>
    %192 = math.exp %191 : vector<2x128xf32>
    %cst_58 = arith.constant 1.000000e+00 : f32
    %193 = vector.broadcast %cst_58 : f32 to vector<2x128xf32>
    %194 = arith.addf %193, %192 : vector<2x128xf32>
    %195 = arith.divf %193, %194 : vector<2x128xf32>
    %196 = vector.extract_strided_slice %195 {offsets = [0, 0], sizes = [2, 32], strides = [1, 1]} : vector<2x128xf32> to vector<2x32xf32>
    %197 = vector.extract_strided_slice %195 {offsets = [0, 32], sizes = [2, 32], strides = [1, 1]} : vector<2x128xf32> to vector<2x32xf32>
    %198 = vector.extract_strided_slice %195 {offsets = [0, 96], sizes = [2, 32], strides = [1, 1]} : vector<2x128xf32> to vector<2x32xf32>
    %199 = vector.extract_strided_slice %190 {offsets = [0, 64], sizes = [2, 32], strides = [1, 1]} : vector<2x128xf32> to vector<2x32xf32>
    %200 = math.tanh %199 : vector<2x32xf32>
    %201 = arith.mulf %197, %154 : vector<2x32xf32>
    %202 = arith.mulf %196, %200 : vector<2x32xf32>
    %203 = arith.addf %201, %202 : vector<2x32xf32>
    %204 = math.tanh %203 : vector<2x32xf32>
    %205 = arith.mulf %198, %204 : vector<2x32xf32>
    %cst_59 = arith.constant dense<0.000000e+00> : vector<2x6xf32>
    %206 = tpu.matmul %205, %7, %cst_59 {dimension_numbers = #tpu.dot_dimension_numbers<[1], [0], [0], [1], [0, 0, 1, 1], [], []>} : vector<2x32xf32>, vector<32x6xf32>, vector<2x6xf32> -> vector<2x6xf32>
    %207 = vector.broadcast %8 : vector<1x6xf32> to vector<2x6xf32>
    %208 = arith.addf %206, %207 : vector<2x6xf32>
    %209 = arith.index_cast %c3_i32 : i32 to index
    %c0_60 = arith.constant 0 : index
    %c0_61 = arith.constant 0 : index
    %210 = vector.load %arg9[%209, %c0_60, %c0_61] : memref<8x2x6xf32, #tpu.memory_space<vmem>>, vector<1x2x6xf32>
    %211 = vector.shape_cast %210 : vector<1x2x6xf32> to vector<2x6xf32>
    %212 = vector.shape_cast %208 : vector<2x6xf32> to vector<1x2x6xf32>
    tpu.vector_store %arg9[%209, %c0_60, %c0_61], %212 {strides = array<i32>} : memref<8x2x6xf32, #tpu.memory_space<vmem>>, vector<1x2x6xf32>,
    %213 = vector.extract_strided_slice %208 {offsets = [0, 0], sizes = [2, 2], strides = [1, 1]} : vector<2x6xf32> to vector<2x2xf32>
    %c4_i32 = arith.constant 4 : i32
    %214 = arith.index_cast %c4_i32 : i32 to index
    %c0_62 = arith.constant 0 : index
    %c0_63 = arith.constant 0 : index
    %215 = vector.load %arg0[%214, %c0_62, %c0_63] : memref<8x2x4xf32, #tpu.memory_space<vmem>>, vector<1x2x4xf32>
    %216 = vector.shape_cast %215 : vector<1x2x4xf32> to vector<2x4xf32>
    %217 = tpu.concatenate %213, %216, %186 in 1 : vector<2x2xf32>, vector<2x4xf32>, vector<2x32xf32> -> vector<2x38xf32>
    %cst_64 = arith.constant dense<0.000000e+00> : vector<2x128xf32>
    %218 = tpu.matmul %217, %0, %cst_64 {dimension_numbers = #tpu.dot_dimension_numbers<[1], [0], [0], [1], [0, 0, 1, 1], [], []>} : vector<2x38xf32>, vector<38x128xf32>, vector<2x128xf32> -> vector<2x128xf32>
    %219 = vector.broadcast %4 : vector<1x128xf32> to vector<2x128xf32>
    %220 = arith.addf %218, %219 : vector<2x128xf32>
    %221 = arith.negf %220 : vector<2x128xf32>
    %222 = math.exp %221 : vector<2x128xf32>
    %cst_65 = arith.constant 1.000000e+00 : f32
    %223 = vector.broadcast %cst_65 : f32 to vector<2x128xf32>
    %224 = arith.addf %223, %222 : vector<2x128xf32>
    %225 = arith.divf %223, %224 : vector<2x128xf32>
    %226 = vector.extract_strided_slice %225 {offsets = [0, 0], sizes = [2, 32], strides = [1, 1]} : vector<2x128xf32> to vector<2x32xf32>
    %227 = vector.extract_strided_slice %225 {offsets = [0, 32], sizes = [2, 32], strides = [1, 1]} : vector<2x128xf32> to vector<2x32xf32>
    %228 = vector.extract_strided_slice %225 {offsets = [0, 96], sizes = [2, 32], strides = [1, 1]} : vector<2x128xf32> to vector<2x32xf32>
    %229 = vector.extract_strided_slice %220 {offsets = [0, 64], sizes = [2, 32], strides = [1, 1]} : vector<2x128xf32> to vector<2x32xf32>
    %230 = math.tanh %229 : vector<2x32xf32>
    %231 = arith.mulf %227, %184 : vector<2x32xf32>
    %232 = arith.mulf %226, %230 : vector<2x32xf32>
    %233 = arith.addf %231, %232 : vector<2x32xf32>
    %234 = math.tanh %233 : vector<2x32xf32>
    %235 = arith.mulf %228, %234 : vector<2x32xf32>
    %236 = tpu.concatenate %235, %205 in 1 : vector<2x32xf32>, vector<2x32xf32> -> vector<2x64xf32>
    %cst_66 = arith.constant dense<0.000000e+00> : vector<2x128xf32>
    %237 = tpu.matmul %236, %2, %cst_66 {dimension_numbers = #tpu.dot_dimension_numbers<[1], [0], [0], [1], [0, 0, 1, 1], [], []>} : vector<2x64xf32>, vector<64x128xf32>, vector<2x128xf32> -> vector<2x128xf32>
    %238 = vector.broadcast %6 : vector<1x128xf32> to vector<2x128xf32>
    %239 = arith.addf %237, %238 : vector<2x128xf32>
    %240 = arith.negf %239 : vector<2x128xf32>
    %241 = math.exp %240 : vector<2x128xf32>
    %cst_67 = arith.constant 1.000000e+00 : f32
    %242 = vector.broadcast %cst_67 : f32 to vector<2x128xf32>
    %243 = arith.addf %242, %241 : vector<2x128xf32>
    %244 = arith.divf %242, %243 : vector<2x128xf32>
    %245 = vector.extract_strided_slice %244 {offsets = [0, 0], sizes = [2, 32], strides = [1, 1]} : vector<2x128xf32> to vector<2x32xf32>
    %246 = vector.extract_strided_slice %244 {offsets = [0, 32], sizes = [2, 32], strides = [1, 1]} : vector<2x128xf32> to vector<2x32xf32>
    %247 = vector.extract_strided_slice %244 {offsets = [0, 96], sizes = [2, 32], strides = [1, 1]} : vector<2x128xf32> to vector<2x32xf32>
    %248 = vector.extract_strided_slice %239 {offsets = [0, 64], sizes = [2, 32], strides = [1, 1]} : vector<2x128xf32> to vector<2x32xf32>
    %249 = math.tanh %248 : vector<2x32xf32>
    %250 = arith.mulf %246, %203 : vector<2x32xf32>
    %251 = arith.mulf %245, %249 : vector<2x32xf32>
    %252 = arith.addf %250, %251 : vector<2x32xf32>
    %253 = math.tanh %252 : vector<2x32xf32>
    %254 = arith.mulf %247, %253 : vector<2x32xf32>
    %cst_68 = arith.constant dense<0.000000e+00> : vector<2x6xf32>
    %255 = tpu.matmul %254, %7, %cst_68 {dimension_numbers = #tpu.dot_dimension_numbers<[1], [0], [0], [1], [0, 0, 1, 1], [], []>} : vector<2x32xf32>, vector<32x6xf32>, vector<2x6xf32> -> vector<2x6xf32>
    %256 = vector.broadcast %8 : vector<1x6xf32> to vector<2x6xf32>
    %257 = arith.addf %255, %256 : vector<2x6xf32>
    %258 = arith.index_cast %c4_i32 : i32 to index
    %c0_69 = arith.constant 0 : index
    %c0_70 = arith.constant 0 : index
    %259 = vector.load %arg9[%258, %c0_69, %c0_70] : memref<8x2x6xf32, #tpu.memory_space<vmem>>, vector<1x2x6xf32>
    %260 = vector.shape_cast %259 : vector<1x2x6xf32> to vector<2x6xf32>
    %261 = vector.shape_cast %257 : vector<2x6xf32> to vector<1x2x6xf32>
    tpu.vector_store %arg9[%258, %c0_69, %c0_70], %261 {strides = array<i32>} : memref<8x2x6xf32, #tpu.memory_space<vmem>>, vector<1x2x6xf32>,
    %262 = vector.extract_strided_slice %257 {offsets = [0, 0], sizes = [2, 2], strides = [1, 1]} : vector<2x6xf32> to vector<2x2xf32>
    %c5_i32 = arith.constant 5 : i32
    %263 = arith.index_cast %c5_i32 : i32 to index
    %c0_71 = arith.constant 0 : index
    %c0_72 = arith.constant 0 : index
    %264 = vector.load %arg0[%263, %c0_71, %c0_72] : memref<8x2x4xf32, #tpu.memory_space<vmem>>, vector<1x2x4xf32>
    %265 = vector.shape_cast %264 : vector<1x2x4xf32> to vector<2x4xf32>
    %266 = tpu.concatenate %262, %265, %235 in 1 : vector<2x2xf32>, vector<2x4xf32>, vector<2x32xf32> -> vector<2x38xf32>
    %cst_73 = arith.constant dense<0.000000e+00> : vector<2x128xf32>
    %267 = tpu.matmul %266, %0, %cst_73 {dimension_numbers = #tpu.dot_dimension_numbers<[1], [0], [0], [1], [0, 0, 1, 1], [], []>} : vector<2x38xf32>, vector<38x128xf32>, vector<2x128xf32> -> vector<2x128xf32>
    %268 = vector.broadcast %4 : vector<1x128xf32> to vector<2x128xf32>
    %269 = arith.addf %267, %268 : vector<2x128xf32>
    %270 = arith.negf %269 : vector<2x128xf32>
    %271 = math.exp %270 : vector<2x128xf32>
    %cst_74 = arith.constant 1.000000e+00 : f32
    %272 = vector.broadcast %cst_74 : f32 to vector<2x128xf32>
    %273 = arith.addf %272, %271 : vector<2x128xf32>
    %274 = arith.divf %272, %273 : vector<2x128xf32>
    %275 = vector.extract_strided_slice %274 {offsets = [0, 0], sizes = [2, 32], strides = [1, 1]} : vector<2x128xf32> to vector<2x32xf32>
    %276 = vector.extract_strided_slice %274 {offsets = [0, 32], sizes = [2, 32], strides = [1, 1]} : vector<2x128xf32> to vector<2x32xf32>
    %277 = vector.extract_strided_slice %274 {offsets = [0, 96], sizes = [2, 32], strides = [1, 1]} : vector<2x128xf32> to vector<2x32xf32>
    %278 = vector.extract_strided_slice %269 {offsets = [0, 64], sizes = [2, 32], strides = [1, 1]} : vector<2x128xf32> to vector<2x32xf32>
    %279 = math.tanh %278 : vector<2x32xf32>
    %280 = arith.mulf %276, %233 : vector<2x32xf32>
    %281 = arith.mulf %275, %279 : vector<2x32xf32>
    %282 = arith.addf %280, %281 : vector<2x32xf32>
    %283 = math.tanh %282 : vector<2x32xf32>
    %284 = arith.mulf %277, %283 : vector<2x32xf32>
    %285 = tpu.concatenate %284, %254 in 1 : vector<2x32xf32>, vector<2x32xf32> -> vector<2x64xf32>
    %cst_75 = arith.constant dense<0.000000e+00> : vector<2x128xf32>
    %286 = tpu.matmul %285, %2, %cst_75 {dimension_numbers = #tpu.dot_dimension_numbers<[1], [0], [0], [1], [0, 0, 1, 1], [], []>} : vector<2x64xf32>, vector<64x128xf32>, vector<2x128xf32> -> vector<2x128xf32>
    %287 = vector.broadcast %6 : vector<1x128xf32> to vector<2x128xf32>
    %288 = arith.addf %286, %287 : vector<2x128xf32>
    %289 = arith.negf %288 : vector<2x128xf32>
    %290 = math.exp %289 : vector<2x128xf32>
    %cst_76 = arith.constant 1.000000e+00 : f32
    %291 = vector.broadcast %cst_76 : f32 to vector<2x128xf32>
    %292 = arith.addf %291, %290 : vector<2x128xf32>
    %293 = arith.divf %291, %292 : vector<2x128xf32>
    %294 = vector.extract_strided_slice %293 {offsets = [0, 0], sizes = [2, 32], strides = [1, 1]} : vector<2x128xf32> to vector<2x32xf32>
    %295 = vector.extract_strided_slice %293 {offsets = [0, 32], sizes = [2, 32], strides = [1, 1]} : vector<2x128xf32> to vector<2x32xf32>
    %296 = vector.extract_strided_slice %293 {offsets = [0, 96], sizes = [2, 32], strides = [1, 1]} : vector<2x128xf32> to vector<2x32xf32>
    %297 = vector.extract_strided_slice %288 {offsets = [0, 64], sizes = [2, 32], strides = [1, 1]} : vector<2x128xf32> to vector<2x32xf32>
    %298 = math.tanh %297 : vector<2x32xf32>
    %299 = arith.mulf %295, %252 : vector<2x32xf32>
    %300 = arith.mulf %294, %298 : vector<2x32xf32>
    %301 = arith.addf %299, %300 : vector<2x32xf32>
    %302 = math.tanh %301 : vector<2x32xf32>
    %303 = arith.mulf %296, %302 : vector<2x32xf32>
    %cst_77 = arith.constant dense<0.000000e+00> : vector<2x6xf32>
    %304 = tpu.matmul %303, %7, %cst_77 {dimension_numbers = #tpu.dot_dimension_numbers<[1], [0], [0], [1], [0, 0, 1, 1], [], []>} : vector<2x32xf32>, vector<32x6xf32>, vector<2x6xf32> -> vector<2x6xf32>
    %305 = vector.broadcast %8 : vector<1x6xf32> to vector<2x6xf32>
    %306 = arith.addf %304, %305 : vector<2x6xf32>
    %307 = arith.index_cast %c5_i32 : i32 to index
    %c0_78 = arith.constant 0 : index
    %c0_79 = arith.constant 0 : index
    %308 = vector.load %arg9[%307, %c0_78, %c0_79] : memref<8x2x6xf32, #tpu.memory_space<vmem>>, vector<1x2x6xf32>
    %309 = vector.shape_cast %308 : vector<1x2x6xf32> to vector<2x6xf32>
    %310 = vector.shape_cast %306 : vector<2x6xf32> to vector<1x2x6xf32>
    tpu.vector_store %arg9[%307, %c0_78, %c0_79], %310 {strides = array<i32>} : memref<8x2x6xf32, #tpu.memory_space<vmem>>, vector<1x2x6xf32>,
    %311 = vector.extract_strided_slice %306 {offsets = [0, 0], sizes = [2, 2], strides = [1, 1]} : vector<2x6xf32> to vector<2x2xf32>
    %c6_i32 = arith.constant 6 : i32
    %312 = arith.index_cast %c6_i32 : i32 to index
    %c0_80 = arith.constant 0 : index
    %c0_81 = arith.constant 0 : index
    %313 = vector.load %arg0[%312, %c0_80, %c0_81] : memref<8x2x4xf32, #tpu.memory_space<vmem>>, vector<1x2x4xf32>
    %314 = vector.shape_cast %313 : vector<1x2x4xf32> to vector<2x4xf32>
    %315 = tpu.concatenate %311, %314, %284 in 1 : vector<2x2xf32>, vector<2x4xf32>, vector<2x32xf32> -> vector<2x38xf32>
    %cst_82 = arith.constant dense<0.000000e+00> : vector<2x128xf32>
    %316 = tpu.matmul %315, %0, %cst_82 {dimension_numbers = #tpu.dot_dimension_numbers<[1], [0], [0], [1], [0, 0, 1, 1], [], []>} : vector<2x38xf32>, vector<38x128xf32>, vector<2x128xf32> -> vector<2x128xf32>
    %317 = vector.broadcast %4 : vector<1x128xf32> to vector<2x128xf32>
    %318 = arith.addf %316, %317 : vector<2x128xf32>
    %319 = arith.negf %318 : vector<2x128xf32>
    %320 = math.exp %319 : vector<2x128xf32>
    %cst_83 = arith.constant 1.000000e+00 : f32
    %321 = vector.broadcast %cst_83 : f32 to vector<2x128xf32>
    %322 = arith.addf %321, %320 : vector<2x128xf32>
    %323 = arith.divf %321, %322 : vector<2x128xf32>
    %324 = vector.extract_strided_slice %323 {offsets = [0, 0], sizes = [2, 32], strides = [1, 1]} : vector<2x128xf32> to vector<2x32xf32>
    %325 = vector.extract_strided_slice %323 {offsets = [0, 32], sizes = [2, 32], strides = [1, 1]} : vector<2x128xf32> to vector<2x32xf32>
    %326 = vector.extract_strided_slice %323 {offsets = [0, 96], sizes = [2, 32], strides = [1, 1]} : vector<2x128xf32> to vector<2x32xf32>
    %327 = vector.extract_strided_slice %318 {offsets = [0, 64], sizes = [2, 32], strides = [1, 1]} : vector<2x128xf32> to vector<2x32xf32>
    %328 = math.tanh %327 : vector<2x32xf32>
    %329 = arith.mulf %325, %282 : vector<2x32xf32>
    %330 = arith.mulf %324, %328 : vector<2x32xf32>
    %331 = arith.addf %329, %330 : vector<2x32xf32>
    %332 = math.tanh %331 : vector<2x32xf32>
    %333 = arith.mulf %326, %332 : vector<2x32xf32>
    %334 = tpu.concatenate %333, %303 in 1 : vector<2x32xf32>, vector<2x32xf32> -> vector<2x64xf32>
    %cst_84 = arith.constant dense<0.000000e+00> : vector<2x128xf32>
    %335 = tpu.matmul %334, %2, %cst_84 {dimension_numbers = #tpu.dot_dimension_numbers<[1], [0], [0], [1], [0, 0, 1, 1], [], []>} : vector<2x64xf32>, vector<64x128xf32>, vector<2x128xf32> -> vector<2x128xf32>
    %336 = vector.broadcast %6 : vector<1x128xf32> to vector<2x128xf32>
    %337 = arith.addf %335, %336 : vector<2x128xf32>
    %338 = arith.negf %337 : vector<2x128xf32>
    %339 = math.exp %338 : vector<2x128xf32>
    %cst_85 = arith.constant 1.000000e+00 : f32
    %340 = vector.broadcast %cst_85 : f32 to vector<2x128xf32>
    %341 = arith.addf %340, %339 : vector<2x128xf32>
    %342 = arith.divf %340, %341 : vector<2x128xf32>
    %343 = vector.extract_strided_slice %342 {offsets = [0, 0], sizes = [2, 32], strides = [1, 1]} : vector<2x128xf32> to vector<2x32xf32>
    %344 = vector.extract_strided_slice %342 {offsets = [0, 32], sizes = [2, 32], strides = [1, 1]} : vector<2x128xf32> to vector<2x32xf32>
    %345 = vector.extract_strided_slice %342 {offsets = [0, 96], sizes = [2, 32], strides = [1, 1]} : vector<2x128xf32> to vector<2x32xf32>
    %346 = vector.extract_strided_slice %337 {offsets = [0, 64], sizes = [2, 32], strides = [1, 1]} : vector<2x128xf32> to vector<2x32xf32>
    %347 = math.tanh %346 : vector<2x32xf32>
    %348 = arith.mulf %344, %301 : vector<2x32xf32>
    %349 = arith.mulf %343, %347 : vector<2x32xf32>
    %350 = arith.addf %348, %349 : vector<2x32xf32>
    %351 = math.tanh %350 : vector<2x32xf32>
    %352 = arith.mulf %345, %351 : vector<2x32xf32>
    %cst_86 = arith.constant dense<0.000000e+00> : vector<2x6xf32>
    %353 = tpu.matmul %352, %7, %cst_86 {dimension_numbers = #tpu.dot_dimension_numbers<[1], [0], [0], [1], [0, 0, 1, 1], [], []>} : vector<2x32xf32>, vector<32x6xf32>, vector<2x6xf32> -> vector<2x6xf32>
    %354 = vector.broadcast %8 : vector<1x6xf32> to vector<2x6xf32>
    %355 = arith.addf %353, %354 : vector<2x6xf32>
    %356 = arith.index_cast %c6_i32 : i32 to index
    %c0_87 = arith.constant 0 : index
    %c0_88 = arith.constant 0 : index
    %357 = vector.load %arg9[%356, %c0_87, %c0_88] : memref<8x2x6xf32, #tpu.memory_space<vmem>>, vector<1x2x6xf32>
    %358 = vector.shape_cast %357 : vector<1x2x6xf32> to vector<2x6xf32>
    %359 = vector.shape_cast %355 : vector<2x6xf32> to vector<1x2x6xf32>
    tpu.vector_store %arg9[%356, %c0_87, %c0_88], %359 {strides = array<i32>} : memref<8x2x6xf32, #tpu.memory_space<vmem>>, vector<1x2x6xf32>,
    %360 = vector.extract_strided_slice %355 {offsets = [0, 0], sizes = [2, 2], strides = [1, 1]} : vector<2x6xf32> to vector<2x2xf32>
    %c7_i32 = arith.constant 7 : i32
    %361 = arith.index_cast %c7_i32 : i32 to index
    %c0_89 = arith.constant 0 : index
    %c0_90 = arith.constant 0 : index
    %362 = vector.load %arg0[%361, %c0_89, %c0_90] : memref<8x2x4xf32, #tpu.memory_space<vmem>>, vector<1x2x4xf32>
    %363 = vector.shape_cast %362 : vector<1x2x4xf32> to vector<2x4xf32>
    %364 = tpu.concatenate %360, %363, %333 in 1 : vector<2x2xf32>, vector<2x4xf32>, vector<2x32xf32> -> vector<2x38xf32>
    %cst_91 = arith.constant dense<0.000000e+00> : vector<2x128xf32>
    %365 = tpu.matmul %364, %0, %cst_91 {dimension_numbers = #tpu.dot_dimension_numbers<[1], [0], [0], [1], [0, 0, 1, 1], [], []>} : vector<2x38xf32>, vector<38x128xf32>, vector<2x128xf32> -> vector<2x128xf32>
    %366 = vector.broadcast %4 : vector<1x128xf32> to vector<2x128xf32>
    %367 = arith.addf %365, %366 : vector<2x128xf32>
    %368 = arith.negf %367 : vector<2x128xf32>
    %369 = math.exp %368 : vector<2x128xf32>
    %cst_92 = arith.constant 1.000000e+00 : f32
    %370 = vector.broadcast %cst_92 : f32 to vector<2x128xf32>
    %371 = arith.addf %370, %369 : vector<2x128xf32>
    %372 = arith.divf %370, %371 : vector<2x128xf32>
    %373 = vector.extract_strided_slice %372 {offsets = [0, 0], sizes = [2, 32], strides = [1, 1]} : vector<2x128xf32> to vector<2x32xf32>
    %374 = vector.extract_strided_slice %372 {offsets = [0, 32], sizes = [2, 32], strides = [1, 1]} : vector<2x128xf32> to vector<2x32xf32>
    %375 = vector.extract_strided_slice %372 {offsets = [0, 96], sizes = [2, 32], strides = [1, 1]} : vector<2x128xf32> to vector<2x32xf32>
    %376 = vector.extract_strided_slice %367 {offsets = [0, 64], sizes = [2, 32], strides = [1, 1]} : vector<2x128xf32> to vector<2x32xf32>
    %377 = math.tanh %376 : vector<2x32xf32>
    %378 = arith.mulf %374, %331 : vector<2x32xf32>
    %379 = arith.mulf %373, %377 : vector<2x32xf32>
    %380 = arith.addf %378, %379 : vector<2x32xf32>
    %381 = math.tanh %380 : vector<2x32xf32>
    %382 = arith.mulf %375, %381 : vector<2x32xf32>
    %383 = tpu.concatenate %382, %352 in 1 : vector<2x32xf32>, vector<2x32xf32> -> vector<2x64xf32>
    %cst_93 = arith.constant dense<0.000000e+00> : vector<2x128xf32>
    %384 = tpu.matmul %383, %2, %cst_93 {dimension_numbers = #tpu.dot_dimension_numbers<[1], [0], [0], [1], [0, 0, 1, 1], [], []>} : vector<2x64xf32>, vector<64x128xf32>, vector<2x128xf32> -> vector<2x128xf32>
    %385 = vector.broadcast %6 : vector<1x128xf32> to vector<2x128xf32>
    %386 = arith.addf %384, %385 : vector<2x128xf32>
    %387 = arith.negf %386 : vector<2x128xf32>
    %388 = math.exp %387 : vector<2x128xf32>
    %cst_94 = arith.constant 1.000000e+00 : f32
    %389 = vector.broadcast %cst_94 : f32 to vector<2x128xf32>
    %390 = arith.addf %389, %388 : vector<2x128xf32>
    %391 = arith.divf %389, %390 : vector<2x128xf32>
    %392 = vector.extract_strided_slice %391 {offsets = [0, 0], sizes = [2, 32], strides = [1, 1]} : vector<2x128xf32> to vector<2x32xf32>
    %393 = vector.extract_strided_slice %391 {offsets = [0, 32], sizes = [2, 32], strides = [1, 1]} : vector<2x128xf32> to vector<2x32xf32>
    %394 = vector.extract_strided_slice %391 {offsets = [0, 96], sizes = [2, 32], strides = [1, 1]} : vector<2x128xf32> to vector<2x32xf32>
    %395 = vector.extract_strided_slice %386 {offsets = [0, 64], sizes = [2, 32], strides = [1, 1]} : vector<2x128xf32> to vector<2x32xf32>
    %396 = math.tanh %395 : vector<2x32xf32>
    %397 = arith.mulf %393, %350 : vector<2x32xf32>
    %398 = arith.mulf %392, %396 : vector<2x32xf32>
    %399 = arith.addf %397, %398 : vector<2x32xf32>
    %400 = math.tanh %399 : vector<2x32xf32>
    %401 = arith.mulf %394, %400 : vector<2x32xf32>
    %cst_95 = arith.constant dense<0.000000e+00> : vector<2x6xf32>
    %402 = tpu.matmul %401, %7, %cst_95 {dimension_numbers = #tpu.dot_dimension_numbers<[1], [0], [0], [1], [0, 0, 1, 1], [], []>} : vector<2x32xf32>, vector<32x6xf32>, vector<2x6xf32> -> vector<2x6xf32>
    %403 = vector.broadcast %8 : vector<1x6xf32> to vector<2x6xf32>
    %404 = arith.addf %402, %403 : vector<2x6xf32>
    %405 = arith.index_cast %c7_i32 : i32 to index
    %c0_96 = arith.constant 0 : index
    %c0_97 = arith.constant 0 : index
    %406 = vector.load %arg9[%405, %c0_96, %c0_97] : memref<8x2x6xf32, #tpu.memory_space<vmem>>, vector<1x2x6xf32>
    %407 = vector.shape_cast %406 : vector<1x2x6xf32> to vector<2x6xf32>
    %408 = vector.shape_cast %404 : vector<2x6xf32> to vector<1x2x6xf32>
    tpu.vector_store %arg9[%405, %c0_96, %c0_97], %408 {strides = array<i32>} : memref<8x2x6xf32, #tpu.memory_space<vmem>>, vector<1x2x6xf32>,
    %409 = vector.extract_strided_slice %404 {offsets = [0, 0], sizes = [2, 2], strides = [1, 1]} : vector<2x6xf32> to vector<2x2xf32>
    %c8_i32 = arith.constant 8 : i32
    return
  }
}

</mosaic_0001>

<llo_original>
// kernel: tpu_custom_call.1
$region0: #{tpu_custom_call.1}
  #allocation0 [shape = 'u32[]', space=smem, size = 0x4, offset = 0x4, fixed_abs, tag = 'smem constant byte address 0x4 - core index']
  #allocation1 [shape = 'u32[144,128]{1,0:T(1,128)}', space=vmem, size = 0x12000, scoped, tag = 'internal scratch']
  %s0 = inlined_call_operand.vmem [shape: f32[8,2,4], index: 0, kind: input, shape index: {}]
  %s1 = inlined_call_operand.vmem [shape: f32[2,2], index: 1, kind: input, shape index: {}]
  %s2 = inlined_call_operand.vmem [shape: f32[2,2,32], index: 2, kind: input, shape index: {}]
  %s3 = inlined_call_operand.vmem [shape: f32[2,2,32], index: 3, kind: input, shape index: {}]
  %s4 = inlined_call_operand.hbm [shape: f32[38,128], index: 4, kind: input, shape index: {}]
  %s5 = inlined_call_operand.vmem [shape: f32[1,64,128], index: 5, kind: input, shape index: {}]
  %s6 = inlined_call_operand.vmem [shape: f32[2,1,128], index: 6, kind: input, shape index: {}]
  %s7 = inlined_call_operand.vmem [shape: f32[32,6], index: 7, kind: input, shape index: {}]
  %s8 = inlined_call_operand.vmem [shape: f32[1,6], index: 8, kind: input, shape index: {}]
  %s9 = inlined_call_operand.vmem [shape: f32[8,2,6], index: 9, kind: output, shape index: {}]
  %s10 = sld [smem:[#allocation0]]
  $region50: #{tpu_custom_call.1} parent=0
    _
  %s12 = ssub.s32 1, %s10
  %s13 = scalar_select 0, %s12, %s10
  $region1: #{tpu_custom_call.1} parent=0
    #allocation2 [shape = 'u8[20480]{0}', space=vmem, size = 0x5000, scoped, tag = 'input window, operand 4, single buffered']
    #allocation3 [shape = 's32[1]{0}', space=sflag, size = 0x4, scoped, tag = 'scoped memory for tpu_custom_call.1']
    %14 = vsyncpa [#allocation3], 0
    // Predicated region
    $region2: #{tpu_custom_call.1} parent=1 // pred_check
      _
    $region3: #{tpu_custom_call.1} parent=1 // pred_check_branch
      %16 = sbr.rel (0) target = $region5
    $region4: #{tpu_custom_call.1} parent=1 // pred_region
      _
    $region5: #{tpu_custom_call.1} parent=1 // pred_fallthru
      _
    // Predicated region
    $region6: #{tpu_custom_call.1} parent=1 // pred_check
      _
    $region7: #{tpu_custom_call.1} parent=1 // pred_check_branch
      %18 = sbr.rel (0) target = $region9
    $region8: #{tpu_custom_call.1} parent=1 // pred_region
      _
    $region9: #{tpu_custom_call.1} parent=1 // pred_fallthru
      _
    // Predicated region
    $region10: #{tpu_custom_call.1} parent=1 // pred_check
      _
    $region11: #{tpu_custom_call.1} parent=1 // pred_check_branch
      %20 = sbr.rel (0) target = $region13
    $region12: #{tpu_custom_call.1} parent=1 // pred_region
      _
    $region13: #{tpu_custom_call.1} parent=1 // pred_fallthru
      _
    // Predicated region
    $region14: #{tpu_custom_call.1} parent=1 // pred_check
      _
    $region15: #{tpu_custom_call.1} parent=1 // pred_check_branch
      %22 = sbr.rel (0) target = $region17
    $region16: #{tpu_custom_call.1} parent=1 // pred_region
      _
    $region17: #{tpu_custom_call.1} parent=1 // pred_fallthru
      _
    // Predicated region
    $region18: #{tpu_custom_call.1} parent=1 // pred_check
      _
    $region19: #{tpu_custom_call.1} parent=1 // pred_check_branch
      %24 = sbr.rel (0) target = $region21
    $region20: #{tpu_custom_call.1} parent=1 // pred_region
      %s26 = ssub.s32 640, 640
      %27 = vsyncadd [#allocation3], %s26
      %s28 = sshll.u32 [#allocation2], 4
      %s29 = int_to_ptr.vmem [resolvable:$true] %s28
      %34 = dma.hbm_to_vmem [thread:$0]  %s4, 640, %s29, [#allocation3], 128, 128, 8
    $region21: #{tpu_custom_call.1} parent=1 // pred_fallthru
      _
    // Predicated region
    $region22: #{tpu_custom_call.1} parent=1 // pred_check
      _
    $region23: #{tpu_custom_call.1} parent=1 // pred_check_branch
      %36 = sbr.rel (0) target = $region25
    $region24: #{tpu_custom_call.1} parent=1 // pred_region
      _
    $region25: #{tpu_custom_call.1} parent=1 // pred_fallthru
      _
    // Predicated region
    $region26: #{tpu_custom_call.1} parent=1 // pred_check
      _
    $region27: #{tpu_custom_call.1} parent=1 // pred_check_branch
      %38 = sbr.rel (0) target = $region29
    $region28: #{tpu_custom_call.1} parent=1 // pred_region
      _
    $region29: #{tpu_custom_call.1} parent=1 // pred_fallthru
      _
    // Predicated region
    $region30: #{tpu_custom_call.1} parent=1 // pred_check
      _
    $region31: #{tpu_custom_call.1} parent=1 // pred_check_branch
      %40 = sbr.rel (0) target = $region33
    $region32: #{tpu_custom_call.1} parent=1 // pred_region
      _
    $region33: #{tpu_custom_call.1} parent=1 // pred_fallthru
      _
    // Predicated region
    $region34: #{tpu_custom_call.1} parent=1 // pred_check
      _
    $region35: #{tpu_custom_call.1} parent=1 // pred_check_branch
      %42 = sbr.rel (0) target = $region37
    $region36: #{tpu_custom_call.1} parent=1 // pred_region
      _
    $region37: #{tpu_custom_call.1} parent=1 // pred_fallthru
      _
    // Predicated region
    $region38: #{tpu_custom_call.1} parent=1 // pred_check
      _
    $region39: #{tpu_custom_call.1} parent=1 // pred_check_branch
      %44 = sbr.rel (0) target = $region41
    $region40: #{tpu_custom_call.1} parent=1 // pred_region
      %45 = dma.done [#allocation3], 640
    $region41: #{tpu_custom_call.1} parent=1 // pred_fallthru
      _
    %v46 = vld [vmem:[#allocation2] sm:$0xff]
    %v47 = vld [vmem:[#allocation2 + $0x8] sm:$0xff]
    %v48 = vld [vmem:[#allocation2 + $0x10] sm:$0xff]
    %v49 = vld [vmem:[#allocation2 + $0x18] sm:$0xff]
    %v50 = vld [vmem:[#allocation2 + $0x20] sm:$0x3f]
    %v51 = vld [vmem:[%s5] sm:$0xff]
    %v52 = vld [vmem:[%s5 + $0x8] sm:$0xff]
    %v53 = vld [vmem:[%s5 + $0x10] sm:$0xff]
    %v54 = vld [vmem:[%s5 + $0x18] sm:$0xff]
    %v55 = vld [vmem:[%s5 + $0x20] sm:$0xff]
    %v56 = vld [vmem:[%s5 + $0x28] sm:$0xff]
    %v57 = vld [vmem:[%s5 + $0x30] sm:$0xff]
    %v58 = vld [vmem:[%s5 + $0x38] sm:$0xff]
    %v59 = vld [vmem:[%s6] sm:$0x1]
    %s60 = scalar_lea.vmem %s6, 1
    %v61 = vld [vmem:[%s60] sm:$0x1]
    %v62 = vld [vmem:[%s7] sm:$0xff]
    %v63 = vld [vmem:[%s7 + $0x8] sm:$0xff]
    %v64 = vld [vmem:[%s7 + $0x10] sm:$0xff]
    %v65 = vld [vmem:[%s7 + $0x18] sm:$0xff]
    %v66 = vld [vmem:[%s8] sm:$0x1]
    %v67 = vld [vmem:[%s2] sm:$0x3]
    %s68 = scalar_lea.vmem %s2, 2
    %v69 = vld [vmem:[%s68] sm:$0x3]
    %v70 = vld [vmem:[%s3] sm:$0x3]
    %s71 = scalar_lea.vmem %s3, 2
    %v72 = vld [vmem:[%s71] sm:$0x3]
    %v73 = vld [vmem:[%s1] sm:$0x3]
    %v74 = vld [vmem:[%s0] sm:$0x3]
    %76 = vrot.lane.b32.xlu0 %v74, 2
    %v77 = vpop.permute.xlu0 %76
    %80 = vrot.lane.b32.xlu0 %v67, 6
    %v81 = vpop.permute.xlu0 %80
    %vm83 = vcmask 15360
    %v84 = vsel %vm83, %v73, %v77
    %vm85 = vcmask 48128
    %v86 = vsel %vm85, %v84, %v81
    %v88 = vlaneseq
    %v89 = vshrl.u32 %v88, 7
    %v90 = vsub.s32 0, %v89
    %v91 = vrot.slane %v59, %v90
    %vm93 = vcmask 310272
    %v95 = vsel %vm93, %v86, 0
    %vm97 = vcmask 1045504
    %v99 = vsel %vm97, %v50, 0
    %101 = vmatprep.subr.mxu0 0.0
    %102 = vmatpush1.msra.mxu0 %v46
    %103 = vmatprep.subr.mxu0 0.0
    %104 = vmatpush1.msra.mxu0 %v47
    %105 = vmatprep.subr.mxu0 0.0
    %106 = vmatpush1.msra.mxu0 %v48
    %107 = vmatprep.subr.mxu0 0.0
    %108 = vmatpush1.msra.mxu0 %v49
    %109 = vmatprep.subr.mxu0 0.0
    %110 = vmatpush1.msra.mxu0 %v99
    %111 = vmatprep.subr.mxu0 0.0
    %112 = vmatpush1.msra.mxu0 0.0
    %113 = vmatprep.subr.mxu0 0.0
    %114 = vmatpush1.msra.mxu0 0.0
    %115 = vmatprep.subr.mxu0 0.0
    %116 = vmatpush1.msra.mxu0 0.0
    %117 = vmatprep.subr.mxu0 0.0
    %118 = vmatpush1.msra.mxu0 0.0
    %119 = vmatprep.subr.mxu0 0.0
    %120 = vmatpush1.msra.mxu0 0.0
    %121 = vmatprep.subr.mxu0 0.0
    %122 = vmatpush1.msra.mxu0 0.0
    %123 = vmatprep.subr.mxu0 0.0
    %124 = vmatpush1.msra.mxu0 0.0
    %125 = vmatprep.subr.mxu0 0.0
    %126 = vmatpush1.msra.mxu0 0.0
    %127 = vmatprep.subr.mxu0 0.0
    %128 = vmatpush1.msra.mxu0 0.0
    %129 = vmatprep.subr.mxu0 0.0
    %130 = vmatpush1.msra.mxu0 0.0
    %131 = vmatprep.subr.mxu0 0.0
    %132 = vmatpush1.msra.mxu0 0.0
    %133 = vmatprep.subr.mxu0 0.0
    %134 = vmatpush1.msra.mxu0 0.0
    %135 = vmatprep.subr.mxu0 0.0
    %136 = vmatpush1.msra.mxu0 0.0
    %137 = vmatprep.subr.mxu0 0.0
    %138 = vmatpush1.msra.mxu0 0.0
    %139 = vmatprep.subr.mxu0 0.0
    %140 = vmatpush1.msra.mxu0 0.0
    %141 = vmatprep.subr.mxu0 0.0
    %142 = vmatpush1.msra.mxu0 0.0
    %143 = vmatprep.subr.mxu0 0.0
    %144 = vmatpush1.msra.mxu0 0.0
    %145 = vmatprep.subr.mxu0 0.0
    %146 = vmatpush1.msra.mxu0 0.0
    %147 = vmatprep.subr.mxu0 0.0
    %148 = vmatpush1.msra.mxu0 0.0
    %149 = vmatprep.subr.mxu0 0.0
    %150 = vmatpush1.msra.mxu0 0.0
    %151 = vmatprep.subr.mxu0 0.0
    %152 = vmatpush1.msra.mxu0 0.0
    %153 = vmatprep.subr.mxu0 0.0
    %154 = vmatpush1.msra.mxu0 0.0
    %155 = vmatprep.subr.mxu0 0.0
    %156 = vmatpush1.msra.mxu0 0.0
    %157 = vmatprep.subr.mxu0 0.0
    %158 = vmatpush1.msra.mxu0 0.0
    %159 = vmatprep.subr.mxu0 0.0
    %160 = vmatpush1.msra.mxu0 0.0
    %161 = vmatprep.subr.mxu0 0.0
    %162 = vmatpush1.msra.mxu0 0.0
    %163 = vmatprep.subr.mxu0 0.0
    %164 = vmatpush1.msra.mxu0 0.0
    %165 = vmatprep.mubr.f32.mxu0 0.0
    %166 = vmatmul.mubr.f32.gmra.mrb[0].mxu0 %v95
    %v167 = vpop.f32.mrb[0].mxu0
    %v168 = vadd.f32 %v91, %v167
    %v169 = vpop.f32.mrb[0].mxu0
    %170 = vdwg.mxu0
    %v171 = vxor.u32 %v168, 2147483648
    %v172 = vmul.f32 %v171, 1.442695
    %v173 = vpow.pop %v172
    %v174 = vadd.f32 %v173, 1.0
    %v175 = vrcp.pop %v174
    %v176 = vmul.f32 1.0, %v175
    %v177 = vtanh.pop %v168
    %179 = vrot.lane.b32.xlu0 %v70, 32
    %v180 = vpop.permute.xlu0 %179
    %v182 = vmul.f32 %v176, %v180
    %184 = vrot.lane.b32.xlu0 %v177, 64
    %v185 = vpop.permute.xlu0 %184
    %v187 = vmul.f32 %v176, %v185
    %189 = vrot.lane.b32.xlu0 %v187, 32
    %v190 = vpop.permute.xlu0 %189
    %v192 = vadd.f32 %v182, %v190
    %v193 = vtanh.pop %v192
    %195 = vrot.lane.b32.xlu0 %v193, 64
    %v196 = vpop.permute.xlu0 %195
    %v198 = vmul.f32 %v176, %v196
    %200 = vrot.lane.b32.xlu0 %v198, 32
    %v201 = vpop.permute.xlu0 %200
    %204 = vrot.lane.b32.xlu0 %v69, 32
    %v205 = vpop.permute.xlu0 %204
    %vm207 = vcmask 261120
    %v208 = vsel %vm207, %v201, %v205
    %v210 = vlaneseq
    %v211 = vshrl.u32 %v210, 7
    %v212 = vsub.s32 0, %v211
    %v213 = vrot.slane %v61, %v212
    %vm215 = vcmask 523264
    %v217 = vsel %vm215, %v208, 0
    %219 = vmatprep.subr.mxu0 0.0
    %220 = vmatpush1.msra.mxu0 %v51
    %221 = vmatprep.subr.mxu0 0.0
    %222 = vmatpush1.msra.mxu0 %v52
    %223 = vmatprep.subr.mxu0 0.0
    %224 = vmatpush1.msra.mxu0 %v53
    %225 = vmatprep.subr.mxu0 0.0
    %226 = vmatpush1.msra.mxu0 %v54
    %227 = vmatprep.subr.mxu0 0.0
    %228 = vmatpush1.msra.mxu0 %v55
    %229 = vmatprep.subr.mxu0 0.0
    %230 = vmatpush1.msra.mxu0 %v56
    %231 = vmatprep.subr.mxu0 0.0
    %232 = vmatpush1.msra.mxu0 %v57
    %233 = vmatprep.subr.mxu0 0.0
    %234 = vmatpush1.msra.mxu0 %v58
    %235 = vmatprep.subr.mxu0 0.0
    %236 = vmatpush1.msra.mxu0 0.0
    %237 = vmatprep.subr.mxu0 0.0
    %238 = vmatpush1.msra.mxu0 0.0
    %239 = vmatprep.subr.mxu0 0.0
    %240 = vmatpush1.msra.mxu0 0.0
    %241 = vmatprep.subr.mxu0 0.0
    %242 = vmatpush1.msra.mxu0 0.0
    %243 = vmatprep.subr.mxu0 0.0
    %244 = vmatpush1.msra.mxu0 0.0
    %245 = vmatprep.subr.mxu0 0.0
    %246 = vmatpush1.msra.mxu0 0.0
    %247 = vmatprep.subr.mxu0 0.0
    %248 = vmatpush1.msra.mxu0 0.0
    %249 = vmatprep.subr.mxu0 0.0
    %250 = vmatpush1.msra.mxu0 0.0
    %251 = vmatprep.subr.mxu0 0.0
    %252 = vmatpush1.msra.mxu0 0.0
    %253 = vmatprep.subr.mxu0 0.0
    %254 = vmatpush1.msra.mxu0 0.0
    %255 = vmatprep.subr.mxu0 0.0
    %256 = vmatpush1.msra.mxu0 0.0
    %257 = vmatprep.subr.mxu0 0.0
    %258 = vmatpush1.msra.mxu0 0.0
    %259 = vmatprep.subr.mxu0 0.0
    %260 = vmatpush1.msra.mxu0 0.0
    %261 = vmatprep.subr.mxu0 0.0
    %262 = vmatpush1.msra.mxu0 0.0
    %263 = vmatprep.subr.mxu0 0.0
    %264 = vmatpush1.msra.mxu0 0.0
    %265 = vmatprep.subr.mxu0 0.0
    %266 = vmatpush1.msra.mxu0 0.0
    %267 = vmatprep.subr.mxu0 0.0
    %268 = vmatpush1.msra.mxu0 0.0
    %269 = vmatprep.subr.mxu0 0.0
    %270 = vmatpush1.msra.mxu0 0.0
    %271 = vmatprep.subr.mxu0 0.0
    %272 = vmatpush1.msra.mxu0 0.0
    %273 = vmatprep.subr.mxu0 0.0
    %274 = vmatpush1.msra.mxu0 0.0
    %275 = vmatprep.subr.mxu0 0.0
    %276 = vmatpush1.msra.mxu0 0.0
    %277 = vmatprep.subr.mxu0 0.0
    %278 = vmatpush1.msra.mxu0 0.0
    %279 = vmatprep.subr.mxu0 0.0
    %280 = vmatpush1.msra.mxu0 0.0
    %281 = vmatprep.subr.mxu0 0.0
    %282 = vmatpush1.msra.mxu0 0.0
    %283 = vmatprep.mubr.f32.mxu0 0.0
    %284 = vmatmul.mubr.f32.gmra.mrb[0].mxu0 %v217
    %v285 = vpop.f32.mrb[0].mxu0
    %v286 = vadd.f32 %v213, %v285
    %v287 = vpop.f32.mrb[0].mxu0
    %288 = vdwg.mxu0
    %v289 = vxor.u32 %v286, 2147483648
    %v290 = vmul.f32 %v289, 1.442695
    %v291 = vpow.pop %v290
    %v292 = vadd.f32 %v291, 1.0
    %v293 = vrcp.pop %v292
    %v294 = vmul.f32 1.0, %v293
    %v295 = vtanh.pop %v286
    %297 = vrot.lane.b32.xlu0 %v72, 32
    %v298 = vpop.permute.xlu0 %297
    %v300 = vmul.f32 %v294, %v298
    %302 = vrot.lane.b32.xlu0 %v295, 64
    %v303 = vpop.permute.xlu0 %302
    %v305 = vmul.f32 %v294, %v303
    %307 = vrot.lane.b32.xlu0 %v305, 32
    %v308 = vpop.permute.xlu0 %307
    %v310 = vadd.f32 %v300, %v308
    %v311 = vtanh.pop %v310
    %313 = vrot.lane.b32.xlu0 %v311, 64
    %v314 = vpop.permute.xlu0 %313
    %v316 = vmul.f32 %v294, %v314
    %v318 = vlaneseq
    %v319 = vshrl.u32 %v318, 7
    %v320 = vsub.s32 0, %v319
    %v321 = vrot.slane %v66, %v320
    %324 = vrot.lane.b32.xlu0 %v316, 32
    %v325 = vpop.permute.xlu0 %324
    %v326 = vsel %vm207, %v325, 0
    %328 = vmatprep.subr.mxu0 0.0
    %329 = vmatpush1.msra.mxu0 %v62
    %330 = vmatprep.subr.mxu0 0.0
    %331 = vmatpush1.msra.mxu0 %v63
    %332 = vmatprep.subr.mxu0 0.0
    %333 = vmatpush1.msra.mxu0 %v64
    %334 = vmatprep.subr.mxu0 0.0
    %335 = vmatpush1.msra.mxu0 %v65
    %336 = vmatprep.subr.mxu0 0.0
    %337 = vmatpush1.msra.mxu0 0.0
    %338 = vmatprep.subr.mxu0 0.0
    %339 = vmatpush1.msra.mxu0 0.0
    %340 = vmatprep.subr.mxu0 0.0
    %341 = vmatpush1.msra.mxu0 0.0
    %342 = vmatprep.subr.mxu0 0.0
    %343 = vmatpush1.msra.mxu0 0.0
    %344 = vmatprep.subr.mxu0 0.0
    %345 = vmatpush1.msra.mxu0 0.0
    %346 = vmatprep.subr.mxu0 0.0
    %347 = vmatpush1.msra.mxu0 0.0
    %348 = vmatprep.subr.mxu0 0.0
    %349 = vmatpush1.msra.mxu0 0.0
    %350 = vmatprep.subr.mxu0 0.0
    %351 = vmatpush1.msra.mxu0 0.0
    %352 = vmatprep.subr.mxu0 0.0
    %353 = vmatpush1.msra.mxu0 0.0
    %354 = vmatprep.subr.mxu0 0.0
    %355 = vmatpush1.msra.mxu0 0.0
    %356 = vmatprep.subr.mxu0 0.0
    %357 = vmatpush1.msra.mxu0 0.0
    %358 = vmatprep.subr.mxu0 0.0
    %359 = vmatpush1.msra.mxu0 0.0
    %360 = vmatprep.subr.mxu0 0.0
    %361 = vmatpush1.msra.mxu0 0.0
    %362 = vmatprep.subr.mxu0 0.0
    %363 = vmatpush1.msra.mxu0 0.0
    %364 = vmatprep.subr.mxu0 0.0
    %365 = vmatpush1.msra.mxu0 0.0
    %366 = vmatprep.subr.mxu0 0.0
    %367 = vmatpush1.msra.mxu0 0.0
    %368 = vmatprep.subr.mxu0 0.0
    %369 = vmatpush1.msra.mxu0 0.0
    %370 = vmatprep.subr.mxu0 0.0
    %371 = vmatpush1.msra.mxu0 0.0
    %372 = vmatprep.subr.mxu0 0.0
    %373 = vmatpush1.msra.mxu0 0.0
    %374 = vmatprep.subr.mxu0 0.0
    %375 = vmatpush1.msra.mxu0 0.0
    %376 = vmatprep.subr.mxu0 0.0
    %377 = vmatpush1.msra.mxu0 0.0
    %378 = vmatprep.subr.mxu0 0.0
    %379 = vmatpush1.msra.mxu0 0.0
    %380 = vmatprep.subr.mxu0 0.0
    %381 = vmatpush1.msra.mxu0 0.0
    %382 = vmatprep.subr.mxu0 0.0
    %383 = vmatpush1.msra.mxu0 0.0
    %384 = vmatprep.subr.mxu0 0.0
    %385 = vmatpush1.msra.mxu0 0.0
    %386 = vmatprep.subr.mxu0 0.0
    %387 = vmatpush1.msra.mxu0 0.0
    %388 = vmatprep.subr.mxu0 0.0
    %389 = vmatpush1.msra.mxu0 0.0
    %390 = vmatprep.subr.mxu0 0.0
    %391 = vmatpush1.msra.mxu0 0.0
    %392 = vmatprep.mubr.f32.mxu0 0.0
    %393 = vmatmul.mubr.f32.gmra.mrb[0].mxu0 %v326
    %v394 = vpop.f32.mrb[0].mxu0
    %v395 = vadd.f32 %v321, %v394
    %v396 = vpop.f32.mrb[0].mxu0
    %397 = vdwg.mxu0
    %vm398 = vcmask 41984
    %399 = vst.msk [vmem:[%s9] sm:$0x3] %vm398, %v395
    %s400 = scalar_lea.vmem %s0, 2
    %v401 = vld [vmem:[%s400] sm:$0x3]
    %403 = vrot.lane.b32.xlu0 %v401, 2
    %v404 = vpop.permute.xlu0 %403
    %406 = vrot.lane.b32.xlu0 %v198, 38
    %v407 = vpop.permute.xlu0 %406
    %v409 = vsel %vm83, %v395, %v404
    %v410 = vsel %vm85, %v409, %v407
    %v412 = vsel %vm93, %v410, 0
    %414 = vmatprep.subr.mxu0 0.0
    %415 = vmatpush1.msra.mxu0 %v46
    %416 = vmatprep.subr.mxu0 0.0
    %417 = vmatpush1.msra.mxu0 %v47
    %418 = vmatprep.subr.mxu0 0.0
    %419 = vmatpush1.msra.mxu0 %v48
    %420 = vmatprep.subr.mxu0 0.0
    %421 = vmatpush1.msra.mxu0 %v49
    %422 = vmatprep.subr.mxu0 0.0
    %423 = vmatpush1.msra.mxu0 %v99
    %424 = vmatprep.subr.mxu0 0.0
    %425 = vmatpush1.msra.mxu0 0.0
    %426 = vmatprep.subr.mxu0 0.0
    %427 = vmatpush1.msra.mxu0 0.0
    %428 = vmatprep.subr.mxu0 0.0
    %429 = vmatpush1.msra.mxu0 0.0
    %430 = vmatprep.subr.mxu0 0.0
    %431 = vmatpush1.msra.mxu0 0.0
    %432 = vmatprep.subr.mxu0 0.0
    %433 = vmatpush1.msra.mxu0 0.0
    %434 = vmatprep.subr.mxu0 0.0
    %435 = vmatpush1.msra.mxu0 0.0
    %436 = vmatprep.subr.mxu0 0.0
    %437 = vmatpush1.msra.mxu0 0.0
    %438 = vmatprep.subr.mxu0 0.0
    %439 = vmatpush1.msra.mxu0 0.0
    %440 = vmatprep.subr.mxu0 0.0
    %441 = vmatpush1.msra.mxu0 0.0
    %442 = vmatprep.subr.mxu0 0.0
    %443 = vmatpush1.msra.mxu0 0.0
    %444 = vmatprep.subr.mxu0 0.0
    %445 = vmatpush1.msra.mxu0 0.0
    %446 = vmatprep.subr.mxu0 0.0
    %447 = vmatpush1.msra.mxu0 0.0
    %448 = vmatprep.subr.mxu0 0.0
    %449 = vmatpush1.msra.mxu0 0.0
    %450 = vmatprep.subr.mxu0 0.0
    %451 = vmatpush1.msra.mxu0 0.0
    %452 = vmatprep.subr.mxu0 0.0
    %453 = vmatpush1.msra.mxu0 0.0
    %454 = vmatprep.subr.mxu0 0.0
    %455 = vmatpush1.msra.mxu0 0.0
    %456 = vmatprep.subr.mxu0 0.0
    %457 = vmatpush1.msra.mxu0 0.0
    %458 = vmatprep.subr.mxu0 0.0
    %459 = vmatpush1.msra.mxu0 0.0
    %460 = vmatprep.subr.mxu0 0.0
    %461 = vmatpush1.msra.mxu0 0.0
    %462 = vmatprep.subr.mxu0 0.0
    %463 = vmatpush1.msra.mxu0 0.0
    %464 = vmatprep.subr.mxu0 0.0
    %465 = vmatpush1.msra.mxu0 0.0
    %466 = vmatprep.subr.mxu0 0.0
    %467 = vmatpush1.msra.mxu0 0.0
    %468 = vmatprep.subr.mxu0 0.0
    %469 = vmatpush1.msra.mxu0 0.0
    %470 = vmatprep.subr.mxu0 0.0
    %471 = vmatpush1.msra.mxu0 0.0
    %472 = vmatprep.subr.mxu0 0.0
    %473 = vmatpush1.msra.mxu0 0.0
    %474 = vmatprep.subr.mxu0 0.0
    %475 = vmatpush1.msra.mxu0 0.0
    %476 = vmatprep.subr.mxu0 0.0
    %477 = vmatpush1.msra.mxu0 0.0
    %478 = vmatprep.mubr.f32.mxu0 0.0
    %479 = vmatmul.mubr.f32.gmra.mrb[0].mxu0 %v412
    %v480 = vpop.f32.mrb[0].mxu0
    %v481 = vadd.f32 %v91, %v480
    %v482 = vpop.f32.mrb[0].mxu0
    %483 = vdwg.mxu0
    %v484 = vxor.u32 %v481, 2147483648
    %v485 = vmul.f32 %v484, 1.442695
    %v486 = vpow.pop %v485
    %v487 = vadd.f32 %v486, 1.0
    %v488 = vrcp.pop %v487
    %v489 = vmul.f32 1.0, %v488
    %v490 = vtanh.pop %v481
    %v491 = vmul.f32 %v489, %v192
    %493 = vrot.lane.b32.xlu0 %v490, 64
    %v494 = vpop.permute.xlu0 %493
    %v496 = vmul.f32 %v489, %v494
    %498 = vrot.lane.b32.xlu0 %v496, 32
    %v499 = vpop.permute.xlu0 %498
    %v501 = vadd.f32 %v491, %v499
    %v502 = vtanh.pop %v501
    %504 = vrot.lane.b32.xlu0 %v502, 64
    %v505 = vpop.permute.xlu0 %504
    %v507 = vmul.f32 %v489, %v505
    %509 = vrot.lane.b32.xlu0 %v507, 32
    %v510 = vpop.permute.xlu0 %509
    %512 = vrot.lane.b32.xlu0 %v316, 64
    %v513 = vpop.permute.xlu0 %512
    %v515 = vsel %vm207, %v510, %v513
    %v517 = vsel %vm215, %v515, 0
    %519 = vmatprep.subr.mxu0 0.0
    %520 = vmatpush1.msra.mxu0 %v51
    %521 = vmatprep.subr.mxu0 0.0
    %522 = vmatpush1.msra.mxu0 %v52
    %523 = vmatprep.subr.mxu0 0.0
    %524 = vmatpush1.msra.mxu0 %v53
    %525 = vmatprep.subr.mxu0 0.0
    %526 = vmatpush1.msra.mxu0 %v54
    %527 = vmatprep.subr.mxu0 0.0
    %528 = vmatpush1.msra.mxu0 %v55
    %529 = vmatprep.subr.mxu0 0.0
    %530 = vmatpush1.msra.mxu0 %v56
    %531 = vmatprep.subr.mxu0 0.0
    %532 = vmatpush1.msra.mxu0 %v57
    %533 = vmatprep.subr.mxu0 0.0
    %534 = vmatpush1.msra.mxu0 %v58
    %535 = vmatprep.subr.mxu0 0.0
    %536 = vmatpush1.msra.mxu0 0.0
    %537 = vmatprep.subr.mxu0 0.0
    %538 = vmatpush1.msra.mxu0 0.0
    %539 = vmatprep.subr.mxu0 0.0
    %540 = vmatpush1.msra.mxu0 0.0
    %541 = vmatprep.subr.mxu0 0.0
    %542 = vmatpush1.msra.mxu0 0.0
    %543 = vmatprep.subr.mxu0 0.0
    %544 = vmatpush1.msra.mxu0 0.0
    %545 = vmatprep.subr.mxu0 0.0
    %546 = vmatpush1.msra.mxu0 0.0
    %547 = vmatprep.subr.mxu0 0.0
    %548 = vmatpush1.msra.mxu0 0.0
    %549 = vmatprep.subr.mxu0 0.0
    %550 = vmatpush1.msra.mxu0 0.0
    %551 = vmatprep.subr.mxu0 0.0
    %552 = vmatpush1.msra.mxu0 0.0
    %553 = vmatprep.subr.mxu0 0.0
    %554 = vmatpush1.msra.mxu0 0.0
    %555 = vmatprep.subr.mxu0 0.0
    %556 = vmatpush1.msra.mxu0 0.0
    %557 = vmatprep.subr.mxu0 0.0
    %558 = vmatpush1.msra.mxu0 0.0
    %559 = vmatprep.subr.mxu0 0.0
    %560 = vmatpush1.msra.mxu0 0.0
    %561 = vmatprep.subr.mxu0 0.0
    %562 = vmatpush1.msra.mxu0 0.0
    %563 = vmatprep.subr.mxu0 0.0
    %564 = vmatpush1.msra.mxu0 0.0
    %565 = vmatprep.subr.mxu0 0.0
    %566 = vmatpush1.msra.mxu0 0.0
    %567 = vmatprep.subr.mxu0 0.0
    %568 = vmatpush1.msra.mxu0 0.0
    %569 = vmatprep.subr.mxu0 0.0
    %570 = vmatpush1.msra.mxu0 0.0
    %571 = vmatprep.subr.mxu0 0.0
    %572 = vmatpush1.msra.mxu0 0.0
    %573 = vmatprep.subr.mxu0 0.0
    %574 = vmatpush1.msra.mxu0 0.0
    %575 = vmatprep.subr.mxu0 0.0
    %576 = vmatpush1.msra.mxu0 0.0
    %577 = vmatprep.subr.mxu0 0.0
    %578 = vmatpush1.msra.mxu0 0.0
    %579 = vmatprep.subr.mxu0 0.0
    %580 = vmatpush1.msra.mxu0 0.0
    %581 = vmatprep.subr.mxu0 0.0
    %582 = vmatpush1.msra.mxu0 0.0
    %583 = vmatprep.mubr.f32.mxu0 0.0
    %584 = vmatmul.mubr.f32.gmra.mrb[0].mxu0 %v517
    %v585 = vpop.f32.mrb[0].mxu0
    %v586 = vadd.f32 %v213, %v585
    %v587 = vpop.f32.mrb[0].mxu0
    %588 = vdwg.mxu0
    %v589 = vxor.u32 %v586, 2147483648
    %v590 = vmul.f32 %v589, 1.442695
    %v591 = vpow.pop %v590
    %v592 = vadd.f32 %v591, 1.0
    %v593 = vrcp.pop %v592
    %v594 = vmul.f32 1.0, %v593
    %v595 = vtanh.pop %v586
    %v596 = vmul.f32 %v594, %v310
    %598 = vrot.lane.b32.xlu0 %v595, 64
    %v599 = vpop.permute.xlu0 %598
    %v601 = vmul.f32 %v594, %v599
    %603 = vrot.lane.b32.xlu0 %v601, 32
    %v604 = vpop.permute.xlu0 %603
    %v606 = vadd.f32 %v596, %v604
    %v607 = vtanh.pop %v606
    %609 = vrot.lane.b32.xlu0 %v607, 64
    %v610 = vpop.permute.xlu0 %609
    %v612 = vmul.f32 %v594, %v610
    %614 = vrot.lane.b32.xlu0 %v612, 32
    %v615 = vpop.permute.xlu0 %614
    %v616 = vsel %vm207, %v615, 0
    %618 = vmatprep.subr.mxu0 0.0
    %619 = vmatpush1.msra.mxu0 %v62
    %620 = vmatprep.subr.mxu0 0.0
    %621 = vmatpush1.msra.mxu0 %v63
    %622 = vmatprep.subr.mxu0 0.0
    %623 = vmatpush1.msra.mxu0 %v64
    %624 = vmatprep.subr.mxu0 0.0
    %625 = vmatpush1.msra.mxu0 %v65
    %626 = vmatprep.subr.mxu0 0.0
    %627 = vmatpush1.msra.mxu0 0.0
    %628 = vmatprep.subr.mxu0 0.0
    %629 = vmatpush1.msra.mxu0 0.0
    %630 = vmatprep.subr.mxu0 0.0
    %631 = vmatpush1.msra.mxu0 0.0
    %632 = vmatprep.subr.mxu0 0.0
    %633 = vmatpush1.msra.mxu0 0.0
    %634 = vmatprep.subr.mxu0 0.0
    %635 = vmatpush1.msra.mxu0 0.0
    %636 = vmatprep.subr.mxu0 0.0
    %637 = vmatpush1.msra.mxu0 0.0
    %638 = vmatprep.subr.mxu0 0.0
    %639 = vmatpush1.msra.mxu0 0.0
    %640 = vmatprep.subr.mxu0 0.0
    %641 = vmatpush1.msra.mxu0 0.0
    %642 = vmatprep.subr.mxu0 0.0
    %643 = vmatpush1.msra.mxu0 0.0
    %644 = vmatprep.subr.mxu0 0.0
    %645 = vmatpush1.msra.mxu0 0.0
    %646 = vmatprep.subr.mxu0 0.0
    %647 = vmatpush1.msra.mxu0 0.0
    %648 = vmatprep.subr.mxu0 0.0
    %649 = vmatpush1.msra.mxu0 0.0
    %650 = vmatprep.subr.mxu0 0.0
    %651 = vmatpush1.msra.mxu0 0.0
    %652 = vmatprep.subr.mxu0 0.0
    %653 = vmatpush1.msra.mxu0 0.0
    %654 = vmatprep.subr.mxu0 0.0
    %655 = vmatpush1.msra.mxu0 0.0
    %656 = vmatprep.subr.mxu0 0.0
    %657 = vmatpush1.msra.mxu0 0.0
    %658 = vmatprep.subr.mxu0 0.0
    %659 = vmatpush1.msra.mxu0 0.0
    %660 = vmatprep.subr.mxu0 0.0
    %661 = vmatpush1.msra.mxu0 0.0
    %662 = vmatprep.subr.mxu0 0.0
    %663 = vmatpush1.msra.mxu0 0.0
    %664 = vmatprep.subr.mxu0 0.0
    %665 = vmatpush1.msra.mxu0 0.0
    %666 = vmatprep.subr.mxu0 0.0
    %667 = vmatpush1.msra.mxu0 0.0
    %668 = vmatprep.subr.mxu0 0.0
    %669 = vmatpush1.msra.mxu0 0.0
    %670 = vmatprep.subr.mxu0 0.0
    %671 = vmatpush1.msra.mxu0 0.0
    %672 = vmatprep.subr.mxu0 0.0
    %673 = vmatpush1.msra.mxu0 0.0
    %674 = vmatprep.subr.mxu0 0.0
    %675 = vmatpush1.msra.mxu0 0.0
    %676 = vmatprep.subr.mxu0 0.0
    %677 = vmatpush1.msra.mxu0 0.0
    %678 = vmatprep.subr.mxu0 0.0
    %679 = vmatpush1.msra.mxu0 0.0
    %680 = vmatprep.subr.mxu0 0.0
    %681 = vmatpush1.msra.mxu0 0.0
    %682 = vmatprep.mubr.f32.mxu0 0.0
    %683 = vmatmul.mubr.f32.gmra.mrb[0].mxu0 %v616
    %v684 = vpop.f32.mrb[0].mxu0
    %v685 = vadd.f32 %v321, %v684
    %v686 = vpop.f32.mrb[0].mxu0
    %687 = vdwg.mxu0
    %s688 = scalar_lea.vmem %s9, 2
    %689 = vst.msk [vmem:[%s688] sm:$0x3] %vm398, %v685
    %s690 = scalar_lea.vmem %s0, 4
    %v691 = vld [vmem:[%s690] sm:$0x3]
    %693 = vrot.lane.b32.xlu0 %v691, 2
    %v694 = vpop.permute.xlu0 %693
    %696 = vrot.lane.b32.xlu0 %v507, 38
    %v697 = vpop.permute.xlu0 %696
    %v699 = vsel %vm83, %v685, %v694
    %v700 = vsel %vm85, %v699, %v697
    %v702 = vsel %vm93, %v700, 0
    %704 = vmatprep.subr.mxu0 0.0
    %705 = vmatpush1.msra.mxu0 %v46
    %706 = vmatprep.subr.mxu0 0.0
    %707 = vmatpush1.msra.mxu0 %v47
    %708 = vmatprep.subr.mxu0 0.0
    %709 = vmatpush1.msra.mxu0 %v48
    %710 = vmatprep.subr.mxu0 0.0
    %711 = vmatpush1.msra.mxu0 %v49
    %712 = vmatprep.subr.mxu0 0.0
    %713 = vmatpush1.msra.mxu0 %v99
    %714 = vmatprep.subr.mxu0 0.0
    %715 = vmatpush1.msra.mxu0 0.0
    %716 = vmatprep.subr.mxu0 0.0
    %717 = vmatpush1.msra.mxu0 0.0
    %718 = vmatprep.subr.mxu0 0.0
    %719 = vmatpush1.msra.mxu0 0.0
    %720 = vmatprep.subr.mxu0 0.0
    %721 = vmatpush1.msra.mxu0 0.0
    %722 = vmatprep.subr.mxu0 0.0
    %723 = vmatpush1.msra.mxu0 0.0
    %724 = vmatprep.subr.mxu0 0.0
    %725 = vmatpush1.msra.mxu0 0.0
    %726 = vmatprep.subr.mxu0 0.0
    %727 = vmatpush1.msra.mxu0 0.0
    %728 = vmatprep.subr.mxu0 0.0
    %729 = vmatpush1.msra.mxu0 0.0
    %730 = vmatprep.subr.mxu0 0.0
    %731 = vmatpush1.msra.mxu0 0.0
    %732 = vmatprep.subr.mxu0 0.0
    %733 = vmatpush1.msra.mxu0 0.0
    %734 = vmatprep.subr.mxu0 0.0
    %735 = vmatpush1.msra.mxu0 0.0
    %736 = vmatprep.subr.mxu0 0.0
    %737 = vmatpush1.msra.mxu0 0.0
    %738 = vmatprep.subr.mxu0 0.0
    %739 = vmatpush1.msra.mxu0 0.0
    %740 = vmatprep.subr.mxu0 0.0
    %741 = vmatpush1.msra.mxu0 0.0
    %742 = vmatprep.subr.mxu0 0.0
    %743 = vmatpush1.msra.mxu0 0.0
    %744 = vmatprep.subr.mxu0 0.0
    %745 = vmatpush1.msra.mxu0 0.0
    %746 = vmatprep.subr.mxu0 0.0
    %747 = vmatpush1.msra.mxu0 0.0
    %748 = vmatprep.subr.mxu0 0.0
    %749 = vmatpush1.msra.mxu0 0.0
    %750 = vmatprep.subr.mxu0 0.0
    %751 = vmatpush1.msra.mxu0 0.0
    %752 = vmatprep.subr.mxu0 0.0
    %753 = vmatpush1.msra.mxu0 0.0
    %754 = vmatprep.subr.mxu0 0.0
    %755 = vmatpush1.msra.mxu0 0.0
    %756 = vmatprep.subr.mxu0 0.0
    %757 = vmatpush1.msra.mxu0 0.0
    %758 = vmatprep.subr.mxu0 0.0
    %759 = vmatpush1.msra.mxu0 0.0
    %760 = vmatprep.subr.mxu0 0.0
    %761 = vmatpush1.msra.mxu0 0.0
    %762 = vmatprep.subr.mxu0 0.0
    %763 = vmatpush1.msra.mxu0 0.0
    %764 = vmatprep.subr.mxu0 0.0
    %765 = vmatpush1.msra.mxu0 0.0
    %766 = vmatprep.subr.mxu0 0.0
    %767 = vmatpush1.msra.mxu0 0.0
    %768 = vmatprep.mubr.f32.mxu0 0.0
    %769 = vmatmul.mubr.f32.gmra.mrb[0].mxu0 %v702
    %v770 = vpop.f32.mrb[0].mxu0
    %v771 = vadd.f32 %v91, %v770
    %v772 = vpop.f32.mrb[0].mxu0
    %773 = vdwg.mxu0
    %v774 = vxor.u32 %v771, 2147483648
    %v775 = vmul.f32 %v774, 1.442695
    %v776 = vpow.pop %v775
    %v777 = vadd.f32 %v776, 1.0
    %v778 = vrcp.pop %v777
    %v779 = vmul.f32 1.0, %v778
    %v780 = vtanh.pop %v771
    %v781 = vmul.f32 %v779, %v501
    %783 = vrot.lane.b32.xlu0 %v780, 64
    %v784 = vpop.permute.xlu0 %783
    %v786 = vmul.f32 %v779, %v784
    %788 = vrot.lane.b32.xlu0 %v786, 32
    %v789 = vpop.permute.xlu0 %788
    %v791 = vadd.f32 %v781, %v789
    %v792 = vtanh.pop %v791
    %794 = vrot.lane.b32.xlu0 %v792, 64
    %v795 = vpop.permute.xlu0 %794
    %v797 = vmul.f32 %v779, %v795
    %799 = vrot.lane.b32.xlu0 %v797, 32
    %v800 = vpop.permute.xlu0 %799
    %802 = vrot.lane.b32.xlu0 %v612, 64
    %v803 = vpop.permute.xlu0 %802
    %v805 = vsel %vm207, %v800, %v803
    %v807 = vsel %vm215, %v805, 0
    %809 = vmatprep.subr.mxu0 0.0
    %810 = vmatpush1.msra.mxu0 %v51
    %811 = vmatprep.subr.mxu0 0.0
    %812 = vmatpush1.msra.mxu0 %v52
    %813 = vmatprep.subr.mxu0 0.0
    %814 = vmatpush1.msra.mxu0 %v53
    %815 = vmatprep.subr.mxu0 0.0
    %816 = vmatpush1.msra.mxu0 %v54
    %817 = vmatprep.subr.mxu0 0.0
    %818 = vmatpush1.msra.mxu0 %v55
    %819 = vmatprep.subr.mxu0 0.0
    %820 = vmatpush1.msra.mxu0 %v56
    %821 = vmatprep.subr.mxu0 0.0
    %822 = vmatpush1.msra.mxu0 %v57
    %823 = vmatprep.subr.mxu0 0.0
    %824 = vmatpush1.msra.mxu0 %v58
    %825 = vmatprep.subr.mxu0 0.0
    %826 = vmatpush1.msra.mxu0 0.0
    %827 = vmatprep.subr.mxu0 0.0
    %828 = vmatpush1.msra.mxu0 0.0
    %829 = vmatprep.subr.mxu0 0.0
    %830 = vmatpush1.msra.mxu0 0.0
    %831 = vmatprep.subr.mxu0 0.0
    %832 = vmatpush1.msra.mxu0 0.0
    %833 = vmatprep.subr.mxu0 0.0
    %834 = vmatpush1.msra.mxu0 0.0
    %835 = vmatprep.subr.mxu0 0.0
    %836 = vmatpush1.msra.mxu0 0.0
    %837 = vmatprep.subr.mxu0 0.0
    %838 = vmatpush1.msra.mxu0 0.0
    %839 = vmatprep.subr.mxu0 0.0
    %840 = vmatpush1.msra.mxu0 0.0
    %841 = vmatprep.subr.mxu0 0.0
    %842 = vmatpush1.msra.mxu0 0.0
    %843 = vmatprep.subr.mxu0 0.0
    %844 = vmatpush1.msra.mxu0 0.0
    %845 = vmatprep.subr.mxu0 0.0
    %846 = vmatpush1.msra.mxu0 0.0
    %847 = vmatprep.subr.mxu0 0.0
    %848 = vmatpush1.msra.mxu0 0.0
    %849 = vmatprep.subr.mxu0 0.0
    %850 = vmatpush1.msra.mxu0 0.0
    %851 = vmatprep.subr.mxu0 0.0
    %852 = vmatpush1.msra.mxu0 0.0
    %853 = vmatprep.subr.mxu0 0.0
    %854 = vmatpush1.msra.mxu0 0.0
    %855 = vmatprep.subr.mxu0 0.0
    %856 = vmatpush1.msra.mxu0 0.0
    %857 = vmatprep.subr.mxu0 0.0
    %858 = vmatpush1.msra.mxu0 0.0
    %859 = vmatprep.subr.mxu0 0.0
    %860 = vmatpush1.msra.mxu0 0.0
    %861 = vmatprep.subr.mxu0 0.0
    %862 = vmatpush1.msra.mxu0 0.0
    %863 = vmatprep.subr.mxu0 0.0
    %864 = vmatpush1.msra.mxu0 0.0
    %865 = vmatprep.subr.mxu0 0.0
    %866 = vmatpush1.msra.mxu0 0.0
    %867 = vmatprep.subr.mxu0 0.0
    %868 = vmatpush1.msra.mxu0 0.0
    %869 = vmatprep.subr.mxu0 0.0
    %870 = vmatpush1.msra.mxu0 0.0
    %871 = vmatprep.subr.mxu0 0.0
    %872 = vmatpush1.msra.mxu0 0.0
    %873 = vmatprep.mubr.f32.mxu0 0.0
    %874 = vmatmul.mubr.f32.gmra.mrb[0].mxu0 %v807
    %v875 = vpop.f32.mrb[0].mxu0
    %v876 = vadd.f32 %v213, %v875
    %v877 = vpop.f32.mrb[0].mxu0
    %878 = vdwg.mxu0
    %v879 = vxor.u32 %v876, 2147483648
    %v880 = vmul.f32 %v879, 1.442695
    %v881 = vpow.pop %v880
    %v882 = vadd.f32 %v881, 1.0
    %v883 = vrcp.pop %v882
    %v884 = vmul.f32 1.0, %v883
    %v885 = vtanh.pop %v876
    %v886 = vmul.f32 %v884, %v606
    %888 = vrot.lane.b32.xlu0 %v885, 64
    %v889 = vpop.permute.xlu0 %888
    %v891 = vmul.f32 %v884, %v889
    %893 = vrot.lane.b32.xlu0 %v891, 32
    %v894 = vpop.permute.xlu0 %893
    %v896 = vadd.f32 %v886, %v894
    %v897 = vtanh.pop %v896
    %899 = vrot.lane.b32.xlu0 %v897, 64
    %v900 = vpop.permute.xlu0 %899
    %v902 = vmul.f32 %v884, %v900
    %904 = vrot.lane.b32.xlu0 %v902, 32
    %v905 = vpop.permute.xlu0 %904
    %v906 = vsel %vm207, %v905, 0
    %908 = vmatprep.subr.mxu0 0.0
    %909 = vmatpush1.msra.mxu0 %v62
    %910 = vmatprep.subr.mxu0 0.0
    %911 = vmatpush1.msra.mxu0 %v63
    %912 = vmatprep.subr.mxu0 0.0
    %913 = vmatpush1.msra.mxu0 %v64
    %914 = vmatprep.subr.mxu0 0.0
    %915 = vmatpush1.msra.mxu0 %v65
    %916 = vmatprep.subr.mxu0 0.0
    %917 = vmatpush1.msra.mxu0 0.0
    %918 = vmatprep.subr.mxu0 0.0
    %919 = vmatpush1.msra.mxu0 0.0
    %920 = vmatprep.subr.mxu0 0.0
    %921 = vmatpush1.msra.mxu0 0.0
    %922 = vmatprep.subr.mxu0 0.0
    %923 = vmatpush1.msra.mxu0 0.0
    %924 = vmatprep.subr.mxu0 0.0
    %925 = vmatpush1.msra.mxu0 0.0
    %926 = vmatprep.subr.mxu0 0.0
    %927 = vmatpush1.msra.mxu0 0.0
    %928 = vmatprep.subr.mxu0 0.0
    %929 = vmatpush1.msra.mxu0 0.0
    %930 = vmatprep.subr.mxu0 0.0
    %931 = vmatpush1.msra.mxu0 0.0
    %932 = vmatprep.subr.mxu0 0.0
    %933 = vmatpush1.msra.mxu0 0.0
    %934 = vmatprep.subr.mxu0 0.0
    %935 = vmatpush1.msra.mxu0 0.0
    %936 = vmatprep.subr.mxu0 0.0
    %937 = vmatpush1.msra.mxu0 0.0
    %938 = vmatprep.subr.mxu0 0.0
    %939 = vmatpush1.msra.mxu0 0.0
    %940 = vmatprep.subr.mxu0 0.0
    %941 = vmatpush1.msra.mxu0 0.0
    %942 = vmatprep.subr.mxu0 0.0
    %943 = vmatpush1.msra.mxu0 0.0
    %944 = vmatprep.subr.mxu0 0.0
    %945 = vmatpush1.msra.mxu0 0.0
    %946 = vmatprep.subr.mxu0 0.0
    %947 = vmatpush1.msra.mxu0 0.0
    %948 = vmatprep.subr.mxu0 0.0
    %949 = vmatpush1.msra.mxu0 0.0
    %950 = vmatprep.subr.mxu0 0.0
    %951 = vmatpush1.msra.mxu0 0.0
    %952 = vmatprep.subr.mxu0 0.0
    %953 = vmatpush1.msra.mxu0 0.0
    %954 = vmatprep.subr.mxu0 0.0
    %955 = vmatpush1.msra.mxu0 0.0
    %956 = vmatprep.subr.mxu0 0.0
    %957 = vmatpush1.msra.mxu0 0.0
    %958 = vmatprep.subr.mxu0 0.0
    %959 = vmatpush1.msra.mxu0 0.0
    %960 = vmatprep.subr.mxu0 0.0
    %961 = vmatpush1.msra.mxu0 0.0
    %962 = vmatprep.subr.mxu0 0.0
    %963 = vmatpush1.msra.mxu0 0.0
    %964 = vmatprep.subr.mxu0 0.0
    %965 = vmatpush1.msra.mxu0 0.0
    %966 = vmatprep.subr.mxu0 0.0
    %967 = vmatpush1.msra.mxu0 0.0
    %968 = vmatprep.subr.mxu0 0.0
    %969 = vmatpush1.msra.mxu0 0.0
    %970 = vmatprep.subr.mxu0 0.0
    %971 = vmatpush1.msra.mxu0 0.0
    %972 = vmatprep.mubr.f32.mxu0 0.0
    %973 = vmatmul.mubr.f32.gmra.mrb[0].mxu0 %v906
    %v974 = vpop.f32.mrb[0].mxu0
    %v975 = vadd.f32 %v321, %v974
    %v976 = vpop.f32.mrb[0].mxu0
    %977 = vdwg.mxu0
    %s978 = scalar_lea.vmem %s9, 4
    %979 = vst.msk [vmem:[%s978] sm:$0x3] %vm398, %v975
    %s980 = scalar_lea.vmem %s0, 6
    %v981 = vld [vmem:[%s980] sm:$0x3]
    %983 = vrot.lane.b32.xlu0 %v981, 2
    %v984 = vpop.permute.xlu0 %983
    %986 = vrot.lane.b32.xlu0 %v797, 38
    %v987 = vpop.permute.xlu0 %986
    %v989 = vsel %vm83, %v975, %v984
    %v990 = vsel %vm85, %v989, %v987
    %v992 = vsel %vm93, %v990, 0
    %994 = vmatprep.subr.mxu0 0.0
    %995 = vmatpush1.msra.mxu0 %v46
    %996 = vmatprep.subr.mxu0 0.0
    %997 = vmatpush1.msra.mxu0 %v47
    %998 = vmatprep.subr.mxu0 0.0
    %999 = vmatpush1.msra.mxu0 %v48
    %1000 = vmatprep.subr.mxu0 0.0
    %1001 = vmatpush1.msra.mxu0 %v49
    %1002 = vmatprep.subr.mxu0 0.0
    %1003 = vmatpush1.msra.mxu0 %v99
    %1004 = vmatprep.subr.mxu0 0.0
    %1005 = vmatpush1.msra.mxu0 0.0
    %1006 = vmatprep.subr.mxu0 0.0
    %1007 = vmatpush1.msra.mxu0 0.0
    %1008 = vmatprep.subr.mxu0 0.0
    %1009 = vmatpush1.msra.mxu0 0.0
    %1010 = vmatprep.subr.mxu0 0.0
    %1011 = vmatpush1.msra.mxu0 0.0
    %1012 = vmatprep.subr.mxu0 0.0
    %1013 = vmatpush1.msra.mxu0 0.0
    %1014 = vmatprep.subr.mxu0 0.0
    %1015 = vmatpush1.msra.mxu0 0.0
    %1016 = vmatprep.subr.mxu0 0.0
    %1017 = vmatpush1.msra.mxu0 0.0
    %1018 = vmatprep.subr.mxu0 0.0
    %1019 = vmatpush1.msra.mxu0 0.0
    %1020 = vmatprep.subr.mxu0 0.0
    %1021 = vmatpush1.msra.mxu0 0.0
    %1022 = vmatprep.subr.mxu0 0.0
    %1023 = vmatpush1.msra.mxu0 0.0
    %1024 = vmatprep.subr.mxu0 0.0
    %1025 = vmatpush1.msra.mxu0 0.0
    %1026 = vmatprep.subr.mxu0 0.0
    %1027 = vmatpush1.msra.mxu0 0.0
    %1028 = vmatprep.subr.mxu0 0.0
    %1029 = vmatpush1.msra.mxu0 0.0
    %1030 = vmatprep.subr.mxu0 0.0
    %1031 = vmatpush1.msra.mxu0 0.0
    %1032 = vmatprep.subr.mxu0 0.0
    %1033 = vmatpush1.msra.mxu0 0.0
    %1034 = vmatprep.subr.mxu0 0.0
    %1035 = vmatpush1.msra.mxu0 0.0
    %1036 = vmatprep.subr.mxu0 0.0
    %1037 = vmatpush1.msra.mxu0 0.0
    %1038 = vmatprep.subr.mxu0 0.0
    %1039 = vmatpush1.msra.mxu0 0.0
    %1040 = vmatprep.subr.mxu0 0.0
    %1041 = vmatpush1.msra.mxu0 0.0
    %1042 = vmatprep.subr.mxu0 0.0
    %1043 = vmatpush1.msra.mxu0 0.0
    %1044 = vmatprep.subr.mxu0 0.0
    %1045 = vmatpush1.msra.mxu0 0.0
    %1046 = vmatprep.subr.mxu0 0.0
    %1047 = vmatpush1.msra.mxu0 0.0
    %1048 = vmatprep.subr.mxu0 0.0
    %1049 = vmatpush1.msra.mxu0 0.0
    %1050 = vmatprep.subr.mxu0 0.0
    %1051 = vmatpush1.msra.mxu0 0.0
    %1052 = vmatprep.subr.mxu0 0.0
    %1053 = vmatpush1.msra.mxu0 0.0
    %1054 = vmatprep.subr.mxu0 0.0
    %1055 = vmatpush1.msra.mxu0 0.0
    %1056 = vmatprep.subr.mxu0 0.0
    %1057 = vmatpush1.msra.mxu0 0.0
    %1058 = vmatprep.mubr.f32.mxu0 0.0
    %1059 = vmatmul.mubr.f32.gmra.mrb[0].mxu0 %v992
    %v1060 = vpop.f32.mrb[0].mxu0
    %v1061 = vadd.f32 %v91, %v1060
    %v1062 = vpop.f32.mrb[0].mxu0
    %1063 = vdwg.mxu0
    %v1064 = vxor.u32 %v1061, 2147483648
    %v1065 = vmul.f32 %v1064, 1.442695
    %v1066 = vpow.pop %v1065
    %v1067 = vadd.f32 %v1066, 1.0
    %v1068 = vrcp.pop %v1067
    %v1069 = vmul.f32 1.0, %v1068
    %v1070 = vtanh.pop %v1061
    %v1071 = vmul.f32 %v1069, %v791
    %1073 = vrot.lane.b32.xlu0 %v1070, 64
    %v1074 = vpop.permute.xlu0 %1073
    %v1076 = vmul.f32 %v1069, %v1074
    %1078 = vrot.lane.b32.xlu0 %v1076, 32
    %v1079 = vpop.permute.xlu0 %1078
    %v1081 = vadd.f32 %v1071, %v1079
    %v1082 = vtanh.pop %v1081
    %1084 = vrot.lane.b32.xlu0 %v1082, 64
    %v1085 = vpop.permute.xlu0 %1084
    %v1087 = vmul.f32 %v1069, %v1085
    %1089 = vrot.lane.b32.xlu0 %v1087, 32
    %v1090 = vpop.permute.xlu0 %1089
    %1092 = vrot.lane.b32.xlu0 %v902, 64
    %v1093 = vpop.permute.xlu0 %1092
    %v1095 = vsel %vm207, %v1090, %v1093
    %v1097 = vsel %vm215, %v1095, 0
    %1099 = vmatprep.subr.mxu0 0.0
    %1100 = vmatpush1.msra.mxu0 %v51
    %1101 = vmatprep.subr.mxu0 0.0
    %1102 = vmatpush1.msra.mxu0 %v52
    %1103 = vmatprep.subr.mxu0 0.0
    %1104 = vmatpush1.msra.mxu0 %v53
    %1105 = vmatprep.subr.mxu0 0.0
    %1106 = vmatpush1.msra.mxu0 %v54
    %1107 = vmatprep.subr.mxu0 0.0
    %1108 = vmatpush1.msra.mxu0 %v55
    %1109 = vmatprep.subr.mxu0 0.0
    %1110 = vmatpush1.msra.mxu0 %v56
    %1111 = vmatprep.subr.mxu0 0.0
    %1112 = vmatpush1.msra.mxu0 %v57
    %1113 = vmatprep.subr.mxu0 0.0
    %1114 = vmatpush1.msra.mxu0 %v58
    %1115 = vmatprep.subr.mxu0 0.0
    %1116 = vmatpush1.msra.mxu0 0.0
    %1117 = vmatprep.subr.mxu0 0.0
    %1118 = vmatpush1.msra.mxu0 0.0
    %1119 = vmatprep.subr.mxu0 0.0
    %1120 = vmatpush1.msra.mxu0 0.0
    %1121 = vmatprep.subr.mxu0 0.0
    %1122 = vmatpush1.msra.mxu0 0.0
    %1123 = vmatprep.subr.mxu0 0.0
    %1124 = vmatpush1.msra.mxu0 0.0
    %1125 = vmatprep.subr.mxu0 0.0
    %1126 = vmatpush1.msra.mxu0 0.0
    %1127 = vmatprep.subr.mxu0 0.0
    %1128 = vmatpush1.msra.mxu0 0.0
    %1129 = vmatprep.subr.mxu0 0.0
    %1130 = vmatpush1.msra.mxu0 0.0
    %1131 = vmatprep.subr.mxu0 0.0
    %1132 = vmatpush1.msra.mxu0 0.0
    %1133 = vmatprep.subr.mxu0 0.0
    %1134 = vmatpush1.msra.mxu0 0.0
    %1135 = vmatprep.subr.mxu0 0.0
    %1136 = vmatpush1.msra.mxu0 0.0
    %1137 = vmatprep.subr.mxu0 0.0
    %1138 = vmatpush1.msra.mxu0 0.0
    %1139 = vmatprep.subr.mxu0 0.0
    %1140 = vmatpush1.msra.mxu0 0.0
    %1141 = vmatprep.subr.mxu0 0.0
    %1142 = vmatpush1.msra.mxu0 0.0
    %1143 = vmatprep.subr.mxu0 0.0
    %1144 = vmatpush1.msra.mxu0 0.0
    %1145 = vmatprep.subr.mxu0 0.0
    %1146 = vmatpush1.msra.mxu0 0.0
    %1147 = vmatprep.subr.mxu0 0.0
    %1148 = vmatpush1.msra.mxu0 0.0
    %1149 = vmatprep.subr.mxu0 0.0
    %1150 = vmatpush1.msra.mxu0 0.0
    %1151 = vmatprep.subr.mxu0 0.0
    %1152 = vmatpush1.msra.mxu0 0.0
    %1153 = vmatprep.subr.mxu0 0.0
    %1154 = vmatpush1.msra.mxu0 0.0
    %1155 = vmatprep.subr.mxu0 0.0
    %1156 = vmatpush1.msra.mxu0 0.0
    %1157 = vmatprep.subr.mxu0 0.0
    %1158 = vmatpush1.msra.mxu0 0.0
    %1159 = vmatprep.subr.mxu0 0.0
    %1160 = vmatpush1.msra.mxu0 0.0
    %1161 = vmatprep.subr.mxu0 0.0
    %1162 = vmatpush1.msra.mxu0 0.0
    %1163 = vmatprep.mubr.f32.mxu0 0.0
    %1164 = vmatmul.mubr.f32.gmra.mrb[0].mxu0 %v1097
    %v1165 = vpop.f32.mrb[0].mxu0
    %v1166 = vadd.f32 %v213, %v1165
    %v1167 = vpop.f32.mrb[0].mxu0
    %1168 = vdwg.mxu0
    %v1169 = vxor.u32 %v1166, 2147483648
    %v1170 = vmul.f32 %v1169, 1.442695
    %v1171 = vpow.pop %v1170
    %v1172 = vadd.f32 %v1171, 1.0
    %v1173 = vrcp.pop %v1172
    %v1174 = vmul.f32 1.0, %v1173
    %v1175 = vtanh.pop %v1166
    %v1176 = vmul.f32 %v1174, %v896
    %1178 = vrot.lane.b32.xlu0 %v1175, 64
    %v1179 = vpop.permute.xlu0 %1178
    %v1181 = vmul.f32 %v1174, %v1179
    %1183 = vrot.lane.b32.xlu0 %v1181, 32
    %v1184 = vpop.permute.xlu0 %1183
    %v1186 = vadd.f32 %v1176, %v1184
    %v1187 = vtanh.pop %v1186
    %1189 = vrot.lane.b32.xlu0 %v1187, 64
    %v1190 = vpop.permute.xlu0 %1189
    %v1192 = vmul.f32 %v1174, %v1190
    %1194 = vrot.lane.b32.xlu0 %v1192, 32
    %v1195 = vpop.permute.xlu0 %1194
    %v1196 = vsel %vm207, %v1195, 0
    %1198 = vmatprep.subr.mxu0 0.0
    %1199 = vmatpush1.msra.mxu0 %v62
    %1200 = vmatprep.subr.mxu0 0.0
    %1201 = vmatpush1.msra.mxu0 %v63
    %1202 = vmatprep.subr.mxu0 0.0
    %1203 = vmatpush1.msra.mxu0 %v64
    %1204 = vmatprep.subr.mxu0 0.0
    %1205 = vmatpush1.msra.mxu0 %v65
    %1206 = vmatprep.subr.mxu0 0.0
    %1207 = vmatpush1.msra.mxu0 0.0
    %1208 = vmatprep.subr.mxu0 0.0
    %1209 = vmatpush1.msra.mxu0 0.0
    %1210 = vmatprep.subr.mxu0 0.0
    %1211 = vmatpush1.msra.mxu0 0.0
    %1212 = vmatprep.subr.mxu0 0.0
    %1213 = vmatpush1.msra.mxu0 0.0
    %1214 = vmatprep.subr.mxu0 0.0
    %1215 = vmatpush1.msra.mxu0 0.0
    %1216 = vmatprep.subr.mxu0 0.0
    %1217 = vmatpush1.msra.mxu0 0.0
    %1218 = vmatprep.subr.mxu0 0.0
    %1219 = vmatpush1.msra.mxu0 0.0
    %1220 = vmatprep.subr.mxu0 0.0
    %1221 = vmatpush1.msra.mxu0 0.0
    %1222 = vmatprep.subr.mxu0 0.0
    %1223 = vmatpush1.msra.mxu0 0.0
    %1224 = vmatprep.subr.mxu0 0.0
    %1225 = vmatpush1.msra.mxu0 0.0
    %1226 = vmatprep.subr.mxu0 0.0
    %1227 = vmatpush1.msra.mxu0 0.0
    %1228 = vmatprep.subr.mxu0 0.0
    %1229 = vmatpush1.msra.mxu0 0.0
    %1230 = vmatprep.subr.mxu0 0.0
    %1231 = vmatpush1.msra.mxu0 0.0
    %1232 = vmatprep.subr.mxu0 0.0
    %1233 = vmatpush1.msra.mxu0 0.0
    %1234 = vmatprep.subr.mxu0 0.0
    %1235 = vmatpush1.msra.mxu0 0.0
    %1236 = vmatprep.subr.mxu0 0.0
    %1237 = vmatpush1.msra.mxu0 0.0
    %1238 = vmatprep.subr.mxu0 0.0
    %1239 = vmatpush1.msra.mxu0 0.0
    %1240 = vmatprep.subr.mxu0 0.0
    %1241 = vmatpush1.msra.mxu0 0.0
    %1242 = vmatprep.subr.mxu0 0.0
    %1243 = vmatpush1.msra.mxu0 0.0
    %1244 = vmatprep.subr.mxu0 0.0
    %1245 = vmatpush1.msra.mxu0 0.0
    %1246 = vmatprep.subr.mxu0 0.0
    %1247 = vmatpush1.msra.mxu0 0.0
    %1248 = vmatprep.subr.mxu0 0.0
    %1249 = vmatpush1.msra.mxu0 0.0
    %1250 = vmatprep.subr.mxu0 0.0
    %1251 = vmatpush1.msra.mxu0 0.0
    %1252 = vmatprep.subr.mxu0 0.0
    %1253 = vmatpush1.msra.mxu0 0.0
    %1254 = vmatprep.subr.mxu0 0.0
    %1255 = vmatpush1.msra.mxu0 0.0
    %1256 = vmatprep.subr.mxu0 0.0
    %1257 = vmatpush1.msra.mxu0 0.0
    %1258 = vmatprep.subr.mxu0 0.0
    %1259 = vmatpush1.msra.mxu0 0.0
    %1260 = vmatprep.subr.mxu0 0.0
    %1261 = vmatpush1.msra.mxu0 0.0
    %1262 = vmatprep.mubr.f32.mxu0 0.0
    %1263 = vmatmul.mubr.f32.gmra.mrb[0].mxu0 %v1196
    %v1264 = vpop.f32.mrb[0].mxu0
    %v1265 = vadd.f32 %v321, %v1264
    %v1266 = vpop.f32.mrb[0].mxu0
    %1267 = vdwg.mxu0
    %s1268 = scalar_lea.vmem %s9, 6
    %1269 = vst.msk [vmem:[%s1268] sm:$0x3] %vm398, %v1265
    %s1270 = scalar_lea.vmem %s0, 8
    %v1271 = vld [vmem:[%s1270] sm:$0x3]
    %1273 = vrot.lane.b32.xlu0 %v1271, 2
    %v1274 = vpop.permute.xlu0 %1273
    %1276 = vrot.lane.b32.xlu0 %v1087, 38
    %v1277 = vpop.permute.xlu0 %1276
    %v1279 = vsel %vm83, %v1265, %v1274
    %v1280 = vsel %vm85, %v1279, %v1277
    %v1282 = vsel %vm93, %v1280, 0
    %1284 = vmatprep.subr.mxu0 0.0
    %1285 = vmatpush1.msra.mxu0 %v46
    %1286 = vmatprep.subr.mxu0 0.0
    %1287 = vmatpush1.msra.mxu0 %v47
    %1288 = vmatprep.subr.mxu0 0.0
    %1289 = vmatpush1.msra.mxu0 %v48
    %1290 = vmatprep.subr.mxu0 0.0
    %1291 = vmatpush1.msra.mxu0 %v49
    %1292 = vmatprep.subr.mxu0 0.0
    %1293 = vmatpush1.msra.mxu0 %v99
    %1294 = vmatprep.subr.mxu0 0.0
    %1295 = vmatpush1.msra.mxu0 0.0
    %1296 = vmatprep.subr.mxu0 0.0
    %1297 = vmatpush1.msra.mxu0 0.0
    %1298 = vmatprep.subr.mxu0 0.0
    %1299 = vmatpush1.msra.mxu0 0.0
    %1300 = vmatprep.subr.mxu0 0.0
    %1301 = vmatpush1.msra.mxu0 0.0
    %1302 = vmatprep.subr.mxu0 0.0
    %1303 = vmatpush1.msra.mxu0 0.0
    %1304 = vmatprep.subr.mxu0 0.0
    %1305 = vmatpush1.msra.mxu0 0.0
    %1306 = vmatprep.subr.mxu0 0.0
    %1307 = vmatpush1.msra.mxu0 0.0
    %1308 = vmatprep.subr.mxu0 0.0
    %1309 = vmatpush1.msra.mxu0 0.0
    %1310 = vmatprep.subr.mxu0 0.0
    %1311 = vmatpush1.msra.mxu0 0.0
    %1312 = vmatprep.subr.mxu0 0.0
    %1313 = vmatpush1.msra.mxu0 0.0
    %1314 = vmatprep.subr.mxu0 0.0
    %1315 = vmatpush1.msra.mxu0 0.0
    %1316 = vmatprep.subr.mxu0 0.0
    %1317 = vmatpush1.msra.mxu0 0.0
    %1318 = vmatprep.subr.mxu0 0.0
    %1319 = vmatpush1.msra.mxu0 0.0
    %1320 = vmatprep.subr.mxu0 0.0
    %1321 = vmatpush1.msra.mxu0 0.0
    %1322 = vmatprep.subr.mxu0 0.0
    %1323 = vmatpush1.msra.mxu0 0.0
    %1324 = vmatprep.subr.mxu0 0.0
    %1325 = vmatpush1.msra.mxu0 0.0
    %1326 = vmatprep.subr.mxu0 0.0
    %1327 = vmatpush1.msra.mxu0 0.0
    %1328 = vmatprep.subr.mxu0 0.0
    %1329 = vmatpush1.msra.mxu0 0.0
    %1330 = vmatprep.subr.mxu0 0.0
    %1331 = vmatpush1.msra.mxu0 0.0
    %1332 = vmatprep.subr.mxu0 0.0
    %1333 = vmatpush1.msra.mxu0 0.0
    %1334 = vmatprep.subr.mxu0 0.0
    %1335 = vmatpush1.msra.mxu0 0.0
    %1336 = vmatprep.subr.mxu0 0.0
    %1337 = vmatpush1.msra.mxu0 0.0
    %1338 = vmatprep.subr.mxu0 0.0
    %1339 = vmatpush1.msra.mxu0 0.0
    %1340 = vmatprep.subr.mxu0 0.0
    %1341 = vmatpush1.msra.mxu0 0.0
    %1342 = vmatprep.subr.mxu0 0.0
    %1343 = vmatpush1.msra.mxu0 0.0
    %1344 = vmatprep.subr.mxu0 0.0
    %1345 = vmatpush1.msra.mxu0 0.0
    %1346 = vmatprep.subr.mxu0 0.0
    %1347 = vmatpush1.msra.mxu0 0.0
    %1348 = vmatprep.mubr.f32.mxu0 0.0
    %1349 = vmatmul.mubr.f32.gmra.mrb[0].mxu0 %v1282
    %v1350 = vpop.f32.mrb[0].mxu0
    %v1351 = vadd.f32 %v91, %v1350
    %v1352 = vpop.f32.mrb[0].mxu0
    %1353 = vdwg.mxu0
    %v1354 = vxor.u32 %v1351, 2147483648
    %v1355 = vmul.f32 %v1354, 1.442695
    %v1356 = vpow.pop %v1355
    %v1357 = vadd.f32 %v1356, 1.0
    %v1358 = vrcp.pop %v1357
    %v1359 = vmul.f32 1.0, %v1358
    %v1360 = vtanh.pop %v1351
    %v1361 = vmul.f32 %v1359, %v1081
    %1363 = vrot.lane.b32.xlu0 %v1360, 64
    %v1364 = vpop.permute.xlu0 %1363
    %v1366 = vmul.f32 %v1359, %v1364
    %1368 = vrot.lane.b32.xlu0 %v1366, 32
    %v1369 = vpop.permute.xlu0 %1368
    %v1371 = vadd.f32 %v1361, %v1369
    %v1372 = vtanh.pop %v1371
    %1374 = vrot.lane.b32.xlu0 %v1372, 64
    %v1375 = vpop.permute.xlu0 %1374
    %v1377 = vmul.f32 %v1359, %v1375
    %1379 = vrot.lane.b32.xlu0 %v1377, 32
    %v1380 = vpop.permute.xlu0 %1379
    %1382 = vrot.lane.b32.xlu0 %v1192, 64
    %v1383 = vpop.permute.xlu0 %1382
    %v1385 = vsel %vm207, %v1380, %v1383
    %v1387 = vsel %vm215, %v1385, 0
    %1389 = vmatprep.subr.mxu0 0.0
    %1390 = vmatpush1.msra.mxu0 %v51
    %1391 = vmatprep.subr.mxu0 0.0
    %1392 = vmatpush1.msra.mxu0 %v52
    %1393 = vmatprep.subr.mxu0 0.0
    %1394 = vmatpush1.msra.mxu0 %v53
    %1395 = vmatprep.subr.mxu0 0.0
    %1396 = vmatpush1.msra.mxu0 %v54
    %1397 = vmatprep.subr.mxu0 0.0
    %1398 = vmatpush1.msra.mxu0 %v55
    %1399 = vmatprep.subr.mxu0 0.0
    %1400 = vmatpush1.msra.mxu0 %v56
    %1401 = vmatprep.subr.mxu0 0.0
    %1402 = vmatpush1.msra.mxu0 %v57
    %1403 = vmatprep.subr.mxu0 0.0
    %1404 = vmatpush1.msra.mxu0 %v58
    %1405 = vmatprep.subr.mxu0 0.0
    %1406 = vmatpush1.msra.mxu0 0.0
    %1407 = vmatprep.subr.mxu0 0.0
    %1408 = vmatpush1.msra.mxu0 0.0
    %1409 = vmatprep.subr.mxu0 0.0
    %1410 = vmatpush1.msra.mxu0 0.0
    %1411 = vmatprep.subr.mxu0 0.0
    %1412 = vmatpush1.msra.mxu0 0.0
    %1413 = vmatprep.subr.mxu0 0.0
    %1414 = vmatpush1.msra.mxu0 0.0
    %1415 = vmatprep.subr.mxu0 0.0
    %1416 = vmatpush1.msra.mxu0 0.0
    %1417 = vmatprep.subr.mxu0 0.0
    %1418 = vmatpush1.msra.mxu0 0.0
    %1419 = vmatprep.subr.mxu0 0.0
    %1420 = vmatpush1.msra.mxu0 0.0
    %1421 = vmatprep.subr.mxu0 0.0
    %1422 = vmatpush1.msra.mxu0 0.0
    %1423 = vmatprep.subr.mxu0 0.0
    %1424 = vmatpush1.msra.mxu0 0.0
    %1425 = vmatprep.subr.mxu0 0.0
    %1426 = vmatpush1.msra.mxu0 0.0
    %1427 = vmatprep.subr.mxu0 0.0
    %1428 = vmatpush1.msra.mxu0 0.0
    %1429 = vmatprep.subr.mxu0 0.0
    %1430 = vmatpush1.msra.mxu0 0.0
    %1431 = vmatprep.subr.mxu0 0.0
    %1432 = vmatpush1.msra.mxu0 0.0
    %1433 = vmatprep.subr.mxu0 0.0
    %1434 = vmatpush1.msra.mxu0 0.0
    %1435 = vmatprep.subr.mxu0 0.0
    %1436 = vmatpush1.msra.mxu0 0.0
    %1437 = vmatprep.subr.mxu0 0.0
    %1438 = vmatpush1.msra.mxu0 0.0
    %1439 = vmatprep.subr.mxu0 0.0
    %1440 = vmatpush1.msra.mxu0 0.0
    %1441 = vmatprep.subr.mxu0 0.0
    %1442 = vmatpush1.msra.mxu0 0.0
    %1443 = vmatprep.subr.mxu0 0.0
    %1444 = vmatpush1.msra.mxu0 0.0
    %1445 = vmatprep.subr.mxu0 0.0
    %1446 = vmatpush1.msra.mxu0 0.0
    %1447 = vmatprep.subr.mxu0 0.0
    %1448 = vmatpush1.msra.mxu0 0.0
    %1449 = vmatprep.subr.mxu0 0.0
    %1450 = vmatpush1.msra.mxu0 0.0
    %1451 = vmatprep.subr.mxu0 0.0
    %1452 = vmatpush1.msra.mxu0 0.0
    %1453 = vmatprep.mubr.f32.mxu0 0.0
    %1454 = vmatmul.mubr.f32.gmra.mrb[0].mxu0 %v1387
    %v1455 = vpop.f32.mrb[0].mxu0
    %v1456 = vadd.f32 %v213, %v1455
    %v1457 = vpop.f32.mrb[0].mxu0
    %1458 = vdwg.mxu0
    %v1459 = vxor.u32 %v1456, 2147483648
    %v1460 = vmul.f32 %v1459, 1.442695
    %v1461 = vpow.pop %v1460
    %v1462 = vadd.f32 %v1461, 1.0
    %v1463 = vrcp.pop %v1462
    %v1464 = vmul.f32 1.0, %v1463
    %v1465 = vtanh.pop %v1456
    %v1466 = vmul.f32 %v1464, %v1186
    %1468 = vrot.lane.b32.xlu0 %v1465, 64
    %v1469 = vpop.permute.xlu0 %1468
    %v1471 = vmul.f32 %v1464, %v1469
    %1473 = vrot.lane.b32.xlu0 %v1471, 32
    %v1474 = vpop.permute.xlu0 %1473
    %v1476 = vadd.f32 %v1466, %v1474
    %v1477 = vtanh.pop %v1476
    %1479 = vrot.lane.b32.xlu0 %v1477, 64
    %v1480 = vpop.permute.xlu0 %1479
    %v1482 = vmul.f32 %v1464, %v1480
    %1484 = vrot.lane.b32.xlu0 %v1482, 32
    %v1485 = vpop.permute.xlu0 %1484
    %v1486 = vsel %vm207, %v1485, 0
    %1488 = vmatprep.subr.mxu0 0.0
    %1489 = vmatpush1.msra.mxu0 %v62
    %1490 = vmatprep.subr.mxu0 0.0
    %1491 = vmatpush1.msra.mxu0 %v63
    %1492 = vmatprep.subr.mxu0 0.0
    %1493 = vmatpush1.msra.mxu0 %v64
    %1494 = vmatprep.subr.mxu0 0.0
    %1495 = vmatpush1.msra.mxu0 %v65
    %1496 = vmatprep.subr.mxu0 0.0
    %1497 = vmatpush1.msra.mxu0 0.0
    %1498 = vmatprep.subr.mxu0 0.0
    %1499 = vmatpush1.msra.mxu0 0.0
    %1500 = vmatprep.subr.mxu0 0.0
    %1501 = vmatpush1.msra.mxu0 0.0
    %1502 = vmatprep.subr.mxu0 0.0
    %1503 = vmatpush1.msra.mxu0 0.0
    %1504 = vmatprep.subr.mxu0 0.0
    %1505 = vmatpush1.msra.mxu0 0.0
    %1506 = vmatprep.subr.mxu0 0.0
    %1507 = vmatpush1.msra.mxu0 0.0
    %1508 = vmatprep.subr.mxu0 0.0
    %1509 = vmatpush1.msra.mxu0 0.0
    %1510 = vmatprep.subr.mxu0 0.0
    %1511 = vmatpush1.msra.mxu0 0.0
    %1512 = vmatprep.subr.mxu0 0.0
    %1513 = vmatpush1.msra.mxu0 0.0
    %1514 = vmatprep.subr.mxu0 0.0
    %1515 = vmatpush1.msra.mxu0 0.0
    %1516 = vmatprep.subr.mxu0 0.0
    %1517 = vmatpush1.msra.mxu0 0.0
    %1518 = vmatprep.subr.mxu0 0.0
    %1519 = vmatpush1.msra.mxu0 0.0
    %1520 = vmatprep.subr.mxu0 0.0
    %1521 = vmatpush1.msra.mxu0 0.0
    %1522 = vmatprep.subr.mxu0 0.0
    %1523 = vmatpush1.msra.mxu0 0.0
    %1524 = vmatprep.subr.mxu0 0.0
    %1525 = vmatpush1.msra.mxu0 0.0
    %1526 = vmatprep.subr.mxu0 0.0
    %1527 = vmatpush1.msra.mxu0 0.0
    %1528 = vmatprep.subr.mxu0 0.0
    %1529 = vmatpush1.msra.mxu0 0.0
    %1530 = vmatprep.subr.mxu0 0.0
    %1531 = vmatpush1.msra.mxu0 0.0
    %1532 = vmatprep.subr.mxu0 0.0
    %1533 = vmatpush1.msra.mxu0 0.0
    %1534 = vmatprep.subr.mxu0 0.0
    %1535 = vmatpush1.msra.mxu0 0.0
    %1536 = vmatprep.subr.mxu0 0.0
    %1537 = vmatpush1.msra.mxu0 0.0
    %1538 = vmatprep.subr.mxu0 0.0
    %1539 = vmatpush1.msra.mxu0 0.0
    %1540 = vmatprep.subr.mxu0 0.0
    %1541 = vmatpush1.msra.mxu0 0.0
    %1542 = vmatprep.subr.mxu0 0.0
    %1543 = vmatpush1.msra.mxu0 0.0
    %1544 = vmatprep.subr.mxu0 0.0
    %1545 = vmatpush1.msra.mxu0 0.0
    %1546 = vmatprep.subr.mxu0 0.0
    %1547 = vmatpush1.msra.mxu0 0.0
    %1548 = vmatprep.subr.mxu0 0.0
    %1549 = vmatpush1.msra.mxu0 0.0
    %1550 = vmatprep.subr.mxu0 0.0
    %1551 = vmatpush1.msra.mxu0 0.0
    %1552 = vmatprep.mubr.f32.mxu0 0.0
    %1553 = vmatmul.mubr.f32.gmra.mrb[0].mxu0 %v1486
    %v1554 = vpop.f32.mrb[0].mxu0
    %v1555 = vadd.f32 %v321, %v1554
    %v1556 = vpop.f32.mrb[0].mxu0
    %1557 = vdwg.mxu0
    %s1558 = scalar_lea.vmem %s9, 8
    %1559 = vst.msk [vmem:[%s1558] sm:$0x3] %vm398, %v1555
    %s1560 = scalar_lea.vmem %s0, 10
    %v1561 = vld [vmem:[%s1560] sm:$0x3]
    %1563 = vrot.lane.b32.xlu0 %v1561, 2
    %v1564 = vpop.permute.xlu0 %1563
    %1566 = vrot.lane.b32.xlu0 %v1377, 38
    %v1567 = vpop.permute.xlu0 %1566
    %v1569 = vsel %vm83, %v1555, %v1564
    %v1570 = vsel %vm85, %v1569, %v1567
    %v1572 = vsel %vm93, %v1570, 0
    %1574 = vmatprep.subr.mxu0 0.0
    %1575 = vmatpush1.msra.mxu0 %v46
    %1576 = vmatprep.subr.mxu0 0.0
    %1577 = vmatpush1.msra.mxu0 %v47
    %1578 = vmatprep.subr.mxu0 0.0
    %1579 = vmatpush1.msra.mxu0 %v48
    %1580 = vmatprep.subr.mxu0 0.0
    %1581 = vmatpush1.msra.mxu0 %v49
    %1582 = vmatprep.subr.mxu0 0.0
    %1583 = vmatpush1.msra.mxu0 %v99
    %1584 = vmatprep.subr.mxu0 0.0
    %1585 = vmatpush1.msra.mxu0 0.0
    %1586 = vmatprep.subr.mxu0 0.0
    %1587 = vmatpush1.msra.mxu0 0.0
    %1588 = vmatprep.subr.mxu0 0.0
    %1589 = vmatpush1.msra.mxu0 0.0
    %1590 = vmatprep.subr.mxu0 0.0
    %1591 = vmatpush1.msra.mxu0 0.0
    %1592 = vmatprep.subr.mxu0 0.0
    %1593 = vmatpush1.msra.mxu0 0.0
    %1594 = vmatprep.subr.mxu0 0.0
    %1595 = vmatpush1.msra.mxu0 0.0
    %1596 = vmatprep.subr.mxu0 0.0
    %1597 = vmatpush1.msra.mxu0 0.0
    %1598 = vmatprep.subr.mxu0 0.0
    %1599 = vmatpush1.msra.mxu0 0.0
    %1600 = vmatprep.subr.mxu0 0.0
    %1601 = vmatpush1.msra.mxu0 0.0
    %1602 = vmatprep.subr.mxu0 0.0
    %1603 = vmatpush1.msra.mxu0 0.0
    %1604 = vmatprep.subr.mxu0 0.0
    %1605 = vmatpush1.msra.mxu0 0.0
    %1606 = vmatprep.subr.mxu0 0.0
    %1607 = vmatpush1.msra.mxu0 0.0
    %1608 = vmatprep.subr.mxu0 0.0
    %1609 = vmatpush1.msra.mxu0 0.0
    %1610 = vmatprep.subr.mxu0 0.0
    %1611 = vmatpush1.msra.mxu0 0.0
    %1612 = vmatprep.subr.mxu0 0.0
    %1613 = vmatpush1.msra.mxu0 0.0
    %1614 = vmatprep.subr.mxu0 0.0
    %1615 = vmatpush1.msra.mxu0 0.0
    %1616 = vmatprep.subr.mxu0 0.0
    %1617 = vmatpush1.msra.mxu0 0.0
    %1618 = vmatprep.subr.mxu0 0.0
    %1619 = vmatpush1.msra.mxu0 0.0
    %1620 = vmatprep.subr.mxu0 0.0
    %1621 = vmatpush1.msra.mxu0 0.0
    %1622 = vmatprep.subr.mxu0 0.0
    %1623 = vmatpush1.msra.mxu0 0.0
    %1624 = vmatprep.subr.mxu0 0.0
    %1625 = vmatpush1.msra.mxu0 0.0
    %1626 = vmatprep.subr.mxu0 0.0
    %1627 = vmatpush1.msra.mxu0 0.0
    %1628 = vmatprep.subr.mxu0 0.0
    %1629 = vmatpush1.msra.mxu0 0.0
    %1630 = vmatprep.subr.mxu0 0.0
    %1631 = vmatpush1.msra.mxu0 0.0
    %1632 = vmatprep.subr.mxu0 0.0
    %1633 = vmatpush1.msra.mxu0 0.0
    %1634 = vmatprep.subr.mxu0 0.0
    %1635 = vmatpush1.msra.mxu0 0.0
    %1636 = vmatprep.subr.mxu0 0.0
    %1637 = vmatpush1.msra.mxu0 0.0
    %1638 = vmatprep.mubr.f32.mxu0 0.0
    %1639 = vmatmul.mubr.f32.gmra.mrb[0].mxu0 %v1572
    %v1640 = vpop.f32.mrb[0].mxu0
    %v1641 = vadd.f32 %v91, %v1640
    %v1642 = vpop.f32.mrb[0].mxu0
    %1643 = vdwg.mxu0
    %v1644 = vxor.u32 %v1641, 2147483648
    %v1645 = vmul.f32 %v1644, 1.442695
    %v1646 = vpow.pop %v1645
    %v1647 = vadd.f32 %v1646, 1.0
    %v1648 = vrcp.pop %v1647
    %v1649 = vmul.f32 1.0, %v1648
    %v1650 = vtanh.pop %v1641
    %v1651 = vmul.f32 %v1649, %v1371
    %1653 = vrot.lane.b32.xlu0 %v1650, 64
    %v1654 = vpop.permute.xlu0 %1653
    %v1656 = vmul.f32 %v1649, %v1654
    %1658 = vrot.lane.b32.xlu0 %v1656, 32
    %v1659 = vpop.permute.xlu0 %1658
    %v1661 = vadd.f32 %v1651, %v1659
    %v1662 = vtanh.pop %v1661
    %1664 = vrot.lane.b32.xlu0 %v1662, 64
    %v1665 = vpop.permute.xlu0 %1664
    %v1667 = vmul.f32 %v1649, %v1665
    %1669 = vrot.lane.b32.xlu0 %v1667, 32
    %v1670 = vpop.permute.xlu0 %1669
    %1672 = vrot.lane.b32.xlu0 %v1482, 64
    %v1673 = vpop.permute.xlu0 %1672
    %v1675 = vsel %vm207, %v1670, %v1673
    %v1677 = vsel %vm215, %v1675, 0
    %1679 = vmatprep.subr.mxu0 0.0
    %1680 = vmatpush1.msra.mxu0 %v51
    %1681 = vmatprep.subr.mxu0 0.0
    %1682 = vmatpush1.msra.mxu0 %v52
    %1683 = vmatprep.subr.mxu0 0.0
    %1684 = vmatpush1.msra.mxu0 %v53
    %1685 = vmatprep.subr.mxu0 0.0
    %1686 = vmatpush1.msra.mxu0 %v54
    %1687 = vmatprep.subr.mxu0 0.0
    %1688 = vmatpush1.msra.mxu0 %v55
    %1689 = vmatprep.subr.mxu0 0.0
    %1690 = vmatpush1.msra.mxu0 %v56
    %1691 = vmatprep.subr.mxu0 0.0
    %1692 = vmatpush1.msra.mxu0 %v57
    %1693 = vmatprep.subr.mxu0 0.0
    %1694 = vmatpush1.msra.mxu0 %v58
    %1695 = vmatprep.subr.mxu0 0.0
    %1696 = vmatpush1.msra.mxu0 0.0
    %1697 = vmatprep.subr.mxu0 0.0
    %1698 = vmatpush1.msra.mxu0 0.0
    %1699 = vmatprep.subr.mxu0 0.0
    %1700 = vmatpush1.msra.mxu0 0.0
    %1701 = vmatprep.subr.mxu0 0.0
    %1702 = vmatpush1.msra.mxu0 0.0
    %1703 = vmatprep.subr.mxu0 0.0
    %1704 = vmatpush1.msra.mxu0 0.0
    %1705 = vmatprep.subr.mxu0 0.0
    %1706 = vmatpush1.msra.mxu0 0.0
    %1707 = vmatprep.subr.mxu0 0.0
    %1708 = vmatpush1.msra.mxu0 0.0
    %1709 = vmatprep.subr.mxu0 0.0
    %1710 = vmatpush1.msra.mxu0 0.0
    %1711 = vmatprep.subr.mxu0 0.0
    %1712 = vmatpush1.msra.mxu0 0.0
    %1713 = vmatprep.subr.mxu0 0.0
    %1714 = vmatpush1.msra.mxu0 0.0
    %1715 = vmatprep.subr.mxu0 0.0
    %1716 = vmatpush1.msra.mxu0 0.0
    %1717 = vmatprep.subr.mxu0 0.0
    %1718 = vmatpush1.msra.mxu0 0.0
    %1719 = vmatprep.subr.mxu0 0.0
    %1720 = vmatpush1.msra.mxu0 0.0
    %1721 = vmatprep.subr.mxu0 0.0
    %1722 = vmatpush1.msra.mxu0 0.0
    %1723 = vmatprep.subr.mxu0 0.0
    %1724 = vmatpush1.msra.mxu0 0.0
    %1725 = vmatprep.subr.mxu0 0.0
    %1726 = vmatpush1.msra.mxu0 0.0
    %1727 = vmatprep.subr.mxu0 0.0
    %1728 = vmatpush1.msra.mxu0 0.0
    %1729 = vmatprep.subr.mxu0 0.0
    %1730 = vmatpush1.msra.mxu0 0.0
    %1731 = vmatprep.subr.mxu0 0.0
    %1732 = vmatpush1.msra.mxu0 0.0
    %1733 = vmatprep.subr.mxu0 0.0
    %1734 = vmatpush1.msra.mxu0 0.0
    %1735 = vmatprep.subr.mxu0 0.0
    %1736 = vmatpush1.msra.mxu0 0.0
    %1737 = vmatprep.subr.mxu0 0.0
    %1738 = vmatpush1.msra.mxu0 0.0
    %1739 = vmatprep.subr.mxu0 0.0
    %1740 = vmatpush1.msra.mxu0 0.0
    %1741 = vmatprep.subr.mxu0 0.0
    %1742 = vmatpush1.msra.mxu0 0.0
    %1743 = vmatprep.mubr.f32.mxu0 0.0
    %1744 = vmatmul.mubr.f32.gmra.mrb[0].mxu0 %v1677
    %v1745 = vpop.f32.mrb[0].mxu0
    %v1746 = vadd.f32 %v213, %v1745
    %v1747 = vpop.f32.mrb[0].mxu0
    %1748 = vdwg.mxu0
    %v1749 = vxor.u32 %v1746, 2147483648
    %v1750 = vmul.f32 %v1749, 1.442695
    %v1751 = vpow.pop %v1750
    %v1752 = vadd.f32 %v1751, 1.0
    %v1753 = vrcp.pop %v1752
    %v1754 = vmul.f32 1.0, %v1753
    %v1755 = vtanh.pop %v1746
    %v1756 = vmul.f32 %v1754, %v1476
    %1758 = vrot.lane.b32.xlu0 %v1755, 64
    %v1759 = vpop.permute.xlu0 %1758
    %v1761 = vmul.f32 %v1754, %v1759
    %1763 = vrot.lane.b32.xlu0 %v1761, 32
    %v1764 = vpop.permute.xlu0 %1763
    %v1766 = vadd.f32 %v1756, %v1764
    %v1767 = vtanh.pop %v1766
    %1769 = vrot.lane.b32.xlu0 %v1767, 64
    %v1770 = vpop.permute.xlu0 %1769
    %v1772 = vmul.f32 %v1754, %v1770
    %1774 = vrot.lane.b32.xlu0 %v1772, 32
    %v1775 = vpop.permute.xlu0 %1774
    %v1776 = vsel %vm207, %v1775, 0
    %1778 = vmatprep.subr.mxu0 0.0
    %1779 = vmatpush1.msra.mxu0 %v62
    %1780 = vmatprep.subr.mxu0 0.0
    %1781 = vmatpush1.msra.mxu0 %v63
    %1782 = vmatprep.subr.mxu0 0.0
    %1783 = vmatpush1.msra.mxu0 %v64
    %1784 = vmatprep.subr.mxu0 0.0
    %1785 = vmatpush1.msra.mxu0 %v65
    %1786 = vmatprep.subr.mxu0 0.0
    %1787 = vmatpush1.msra.mxu0 0.0
    %1788 = vmatprep.subr.mxu0 0.0
    %1789 = vmatpush1.msra.mxu0 0.0
    %1790 = vmatprep.subr.mxu0 0.0
    %1791 = vmatpush1.msra.mxu0 0.0
    %1792 = vmatprep.subr.mxu0 0.0
    %1793 = vmatpush1.msra.mxu0 0.0
    %1794 = vmatprep.subr.mxu0 0.0
    %1795 = vmatpush1.msra.mxu0 0.0
    %1796 = vmatprep.subr.mxu0 0.0
    %1797 = vmatpush1.msra.mxu0 0.0
    %1798 = vmatprep.subr.mxu0 0.0
    %1799 = vmatpush1.msra.mxu0 0.0
    %1800 = vmatprep.subr.mxu0 0.0
    %1801 = vmatpush1.msra.mxu0 0.0
    %1802 = vmatprep.subr.mxu0 0.0
    %1803 = vmatpush1.msra.mxu0 0.0
    %1804 = vmatprep.subr.mxu0 0.0
    %1805 = vmatpush1.msra.mxu0 0.0
    %1806 = vmatprep.subr.mxu0 0.0
    %1807 = vmatpush1.msra.mxu0 0.0
    %1808 = vmatprep.subr.mxu0 0.0
    %1809 = vmatpush1.msra.mxu0 0.0
    %1810 = vmatprep.subr.mxu0 0.0
    %1811 = vmatpush1.msra.mxu0 0.0
    %1812 = vmatprep.subr.mxu0 0.0
    %1813 = vmatpush1.msra.mxu0 0.0
    %1814 = vmatprep.subr.mxu0 0.0
    %1815 = vmatpush1.msra.mxu0 0.0
    %1816 = vmatprep.subr.mxu0 0.0
    %1817 = vmatpush1.msra.mxu0 0.0
    %1818 = vmatprep.subr.mxu0 0.0
    %1819 = vmatpush1.msra.mxu0 0.0
    %1820 = vmatprep.subr.mxu0 0.0
    %1821 = vmatpush1.msra.mxu0 0.0
    %1822 = vmatprep.subr.mxu0 0.0
    %1823 = vmatpush1.msra.mxu0 0.0
    %1824 = vmatprep.subr.mxu0 0.0
    %1825 = vmatpush1.msra.mxu0 0.0
    %1826 = vmatprep.subr.mxu0 0.0
    %1827 = vmatpush1.msra.mxu0 0.0
    %1828 = vmatprep.subr.mxu0 0.0
    %1829 = vmatpush1.msra.mxu0 0.0
    %1830 = vmatprep.subr.mxu0 0.0
    %1831 = vmatpush1.msra.mxu0 0.0
    %1832 = vmatprep.subr.mxu0 0.0
    %1833 = vmatpush1.msra.mxu0 0.0
    %1834 = vmatprep.subr.mxu0 0.0
    %1835 = vmatpush1.msra.mxu0 0.0
    %1836 = vmatprep.subr.mxu0 0.0
    %1837 = vmatpush1.msra.mxu0 0.0
    %1838 = vmatprep.subr.mxu0 0.0
    %1839 = vmatpush1.msra.mxu0 0.0
    %1840 = vmatprep.subr.mxu0 0.0
    %1841 = vmatpush1.msra.mxu0 0.0
    %1842 = vmatprep.mubr.f32.mxu0 0.0
    %1843 = vmatmul.mubr.f32.gmra.mrb[0].mxu0 %v1776
    %v1844 = vpop.f32.mrb[0].mxu0
    %v1845 = vadd.f32 %v321, %v1844
    %v1846 = vpop.f32.mrb[0].mxu0
    %1847 = vdwg.mxu0
    %s1848 = scalar_lea.vmem %s9, 10
    %1849 = vst.msk [vmem:[%s1848] sm:$0x3] %vm398, %v1845
    %s1850 = scalar_lea.vmem %s0, 12
    %v1851 = vld [vmem:[%s1850] sm:$0x3]
    %1853 = vrot.lane.b32.xlu0 %v1851, 2
    %v1854 = vpop.permute.xlu0 %1853
    %1856 = vrot.lane.b32.xlu0 %v1667, 38
    %v1857 = vpop.permute.xlu0 %1856
    %v1859 = vsel %vm83, %v1845, %v1854
    %v1860 = vsel %vm85, %v1859, %v1857
    %v1862 = vsel %vm93, %v1860, 0
    %1864 = vmatprep.subr.mxu0 0.0
    %1865 = vmatpush1.msra.mxu0 %v46
    %1866 = vmatprep.subr.mxu0 0.0
    %1867 = vmatpush1.msra.mxu0 %v47
    %1868 = vmatprep.subr.mxu0 0.0
    %1869 = vmatpush1.msra.mxu0 %v48
    %1870 = vmatprep.subr.mxu0 0.0
    %1871 = vmatpush1.msra.mxu0 %v49
    %1872 = vmatprep.subr.mxu0 0.0
    %1873 = vmatpush1.msra.mxu0 %v99
    %1874 = vmatprep.subr.mxu0 0.0
    %1875 = vmatpush1.msra.mxu0 0.0
    %1876 = vmatprep.subr.mxu0 0.0
    %1877 = vmatpush1.msra.mxu0 0.0
    %1878 = vmatprep.subr.mxu0 0.0
    %1879 = vmatpush1.msra.mxu0 0.0
    %1880 = vmatprep.subr.mxu0 0.0
    %1881 = vmatpush1.msra.mxu0 0.0
    %1882 = vmatprep.subr.mxu0 0.0
    %1883 = vmatpush1.msra.mxu0 0.0
    %1884 = vmatprep.subr.mxu0 0.0
    %1885 = vmatpush1.msra.mxu0 0.0
    %1886 = vmatprep.subr.mxu0 0.0
    %1887 = vmatpush1.msra.mxu0 0.0
    %1888 = vmatprep.subr.mxu0 0.0
    %1889 = vmatpush1.msra.mxu0 0.0
    %1890 = vmatprep.subr.mxu0 0.0
    %1891 = vmatpush1.msra.mxu0 0.0
    %1892 = vmatprep.subr.mxu0 0.0
    %1893 = vmatpush1.msra.mxu0 0.0
    %1894 = vmatprep.subr.mxu0 0.0
    %1895 = vmatpush1.msra.mxu0 0.0
    %1896 = vmatprep.subr.mxu0 0.0
    %1897 = vmatpush1.msra.mxu0 0.0
    %1898 = vmatprep.subr.mxu0 0.0
    %1899 = vmatpush1.msra.mxu0 0.0
    %1900 = vmatprep.subr.mxu0 0.0
    %1901 = vmatpush1.msra.mxu0 0.0
    %1902 = vmatprep.subr.mxu0 0.0
    %1903 = vmatpush1.msra.mxu0 0.0
    %1904 = vmatprep.subr.mxu0 0.0
    %1905 = vmatpush1.msra.mxu0 0.0
    %1906 = vmatprep.subr.mxu0 0.0
    %1907 = vmatpush1.msra.mxu0 0.0
    %1908 = vmatprep.subr.mxu0 0.0
    %1909 = vmatpush1.msra.mxu0 0.0
    %1910 = vmatprep.subr.mxu0 0.0
    %1911 = vmatpush1.msra.mxu0 0.0
    %1912 = vmatprep.subr.mxu0 0.0
    %1913 = vmatpush1.msra.mxu0 0.0
    %1914 = vmatprep.subr.mxu0 0.0
    %1915 = vmatpush1.msra.mxu0 0.0
    %1916 = vmatprep.subr.mxu0 0.0
    %1917 = vmatpush1.msra.mxu0 0.0
    %1918 = vmatprep.subr.mxu0 0.0
    %1919 = vmatpush1.msra.mxu0 0.0
    %1920 = vmatprep.subr.mxu0 0.0
    %1921 = vmatpush1.msra.mxu0 0.0
    %1922 = vmatprep.subr.mxu0 0.0
    %1923 = vmatpush1.msra.mxu0 0.0
    %1924 = vmatprep.subr.mxu0 0.0
    %1925 = vmatpush1.msra.mxu0 0.0
    %1926 = vmatprep.subr.mxu0 0.0
    %1927 = vmatpush1.msra.mxu0 0.0
    %1928 = vmatprep.mubr.f32.mxu0 0.0
    %1929 = vmatmul.mubr.f32.gmra.mrb[0].mxu0 %v1862
    %v1930 = vpop.f32.mrb[0].mxu0
    %v1931 = vadd.f32 %v91, %v1930
    %v1932 = vpop.f32.mrb[0].mxu0
    %1933 = vdwg.mxu0
    %v1934 = vxor.u32 %v1931, 2147483648
    %v1935 = vmul.f32 %v1934, 1.442695
    %v1936 = vpow.pop %v1935
    %v1937 = vadd.f32 %v1936, 1.0
    %v1938 = vrcp.pop %v1937
    %v1939 = vmul.f32 1.0, %v1938
    %v1940 = vtanh.pop %v1931
    %v1941 = vmul.f32 %v1939, %v1661
    %1943 = vrot.lane.b32.xlu0 %v1940, 64
    %v1944 = vpop.permute.xlu0 %1943
    %v1946 = vmul.f32 %v1939, %v1944
    %1948 = vrot.lane.b32.xlu0 %v1946, 32
    %v1949 = vpop.permute.xlu0 %1948
    %v1951 = vadd.f32 %v1941, %v1949
    %v1952 = vtanh.pop %v1951
    %1954 = vrot.lane.b32.xlu0 %v1952, 64
    %v1955 = vpop.permute.xlu0 %1954
    %v1957 = vmul.f32 %v1939, %v1955
    %1959 = vrot.lane.b32.xlu0 %v1957, 32
    %v1960 = vpop.permute.xlu0 %1959
    %1962 = vrot.lane.b32.xlu0 %v1772, 64
    %v1963 = vpop.permute.xlu0 %1962
    %v1965 = vsel %vm207, %v1960, %v1963
    %v1967 = vsel %vm215, %v1965, 0
    %1969 = vmatprep.subr.mxu0 0.0
    %1970 = vmatpush1.msra.mxu0 %v51
    %1971 = vmatprep.subr.mxu0 0.0
    %1972 = vmatpush1.msra.mxu0 %v52
    %1973 = vmatprep.subr.mxu0 0.0
    %1974 = vmatpush1.msra.mxu0 %v53
    %1975 = vmatprep.subr.mxu0 0.0
    %1976 = vmatpush1.msra.mxu0 %v54
    %1977 = vmatprep.subr.mxu0 0.0
    %1978 = vmatpush1.msra.mxu0 %v55
    %1979 = vmatprep.subr.mxu0 0.0
    %1980 = vmatpush1.msra.mxu0 %v56
    %1981 = vmatprep.subr.mxu0 0.0
    %1982 = vmatpush1.msra.mxu0 %v57
    %1983 = vmatprep.subr.mxu0 0.0
    %1984 = vmatpush1.msra.mxu0 %v58
    %1985 = vmatprep.subr.mxu0 0.0
    %1986 = vmatpush1.msra.mxu0 0.0
    %1987 = vmatprep.subr.mxu0 0.0
    %1988 = vmatpush1.msra.mxu0 0.0
    %1989 = vmatprep.subr.mxu0 0.0
    %1990 = vmatpush1.msra.mxu0 0.0
    %1991 = vmatprep.subr.mxu0 0.0
    %1992 = vmatpush1.msra.mxu0 0.0
    %1993 = vmatprep.subr.mxu0 0.0
    %1994 = vmatpush1.msra.mxu0 0.0
    %1995 = vmatprep.subr.mxu0 0.0
    %1996 = vmatpush1.msra.mxu0 0.0
    %1997 = vmatprep.subr.mxu0 0.0
    %1998 = vmatpush1.msra.mxu0 0.0
    %1999 = vmatprep.subr.mxu0 0.0
    %2000 = vmatpush1.msra.mxu0 0.0
    %2001 = vmatprep.subr.mxu0 0.0
    %2002 = vmatpush1.msra.mxu0 0.0
    %2003 = vmatprep.subr.mxu0 0.0
    %2004 = vmatpush1.msra.mxu0 0.0
    %2005 = vmatprep.subr.mxu0 0.0
    %2006 = vmatpush1.msra.mxu0 0.0
    %2007 = vmatprep.subr.mxu0 0.0
    %2008 = vmatpush1.msra.mxu0 0.0
    %2009 = vmatprep.subr.mxu0 0.0
    %2010 = vmatpush1.msra.mxu0 0.0
    %2011 = vmatprep.subr.mxu0 0.0
    %2012 = vmatpush1.msra.mxu0 0.0
    %2013 = vmatprep.subr.mxu0 0.0
    %2014 = vmatpush1.msra.mxu0 0.0
    %2015 = vmatprep.subr.mxu0 0.0
    %2016 = vmatpush1.msra.mxu0 0.0
    %2017 = vmatprep.subr.mxu0 0.0
    %2018 = vmatpush1.msra.mxu0 0.0
    %2019 = vmatprep.subr.mxu0 0.0
    %2020 = vmatpush1.msra.mxu0 0.0
    %2021 = vmatprep.subr.mxu0 0.0
    %2022 = vmatpush1.msra.mxu0 0.0
    %2023 = vmatprep.subr.mxu0 0.0
    %2024 = vmatpush1.msra.mxu0 0.0
    %2025 = vmatprep.subr.mxu0 0.0
    %2026 = vmatpush1.msra.mxu0 0.0
    %2027 = vmatprep.subr.mxu0 0.0
    %2028 = vmatpush1.msra.mxu0 0.0
    %2029 = vmatprep.subr.mxu0 0.0
    %2030 = vmatpush1.msra.mxu0 0.0
    %2031 = vmatprep.subr.mxu0 0.0
    %2032 = vmatpush1.msra.mxu0 0.0
    %2033 = vmatprep.mubr.f32.mxu0 0.0
    %2034 = vmatmul.mubr.f32.gmra.mrb[0].mxu0 %v1967
    %v2035 = vpop.f32.mrb[0].mxu0
    %v2036 = vadd.f32 %v213, %v2035
    %v2037 = vpop.f32.mrb[0].mxu0
    %2038 = vdwg.mxu0
    %v2039 = vxor.u32 %v2036, 2147483648
    %v2040 = vmul.f32 %v2039, 1.442695
    %v2041 = vpow.pop %v2040
    %v2042 = vadd.f32 %v2041, 1.0
    %v2043 = vrcp.pop %v2042
    %v2044 = vmul.f32 1.0, %v2043
    %v2045 = vtanh.pop %v2036
    %v2046 = vmul.f32 %v2044, %v1766
    %2048 = vrot.lane.b32.xlu0 %v2045, 64
    %v2049 = vpop.permute.xlu0 %2048
    %v2051 = vmul.f32 %v2044, %v2049
    %2053 = vrot.lane.b32.xlu0 %v2051, 32
    %v2054 = vpop.permute.xlu0 %2053
    %v2056 = vadd.f32 %v2046, %v2054
    %v2057 = vtanh.pop %v2056
    %2059 = vrot.lane.b32.xlu0 %v2057, 64
    %v2060 = vpop.permute.xlu0 %2059
    %v2062 = vmul.f32 %v2044, %v2060
    %2064 = vrot.lane.b32.xlu0 %v2062, 32
    %v2065 = vpop.permute.xlu0 %2064
    %v2066 = vsel %vm207, %v2065, 0
    %2068 = vmatprep.subr.mxu0 0.0
    %2069 = vmatpush1.msra.mxu0 %v62
    %2070 = vmatprep.subr.mxu0 0.0
    %2071 = vmatpush1.msra.mxu0 %v63
    %2072 = vmatprep.subr.mxu0 0.0
    %2073 = vmatpush1.msra.mxu0 %v64
    %2074 = vmatprep.subr.mxu0 0.0
    %2075 = vmatpush1.msra.mxu0 %v65
    %2076 = vmatprep.subr.mxu0 0.0
    %2077 = vmatpush1.msra.mxu0 0.0
    %2078 = vmatprep.subr.mxu0 0.0
    %2079 = vmatpush1.msra.mxu0 0.0
    %2080 = vmatprep.subr.mxu0 0.0
    %2081 = vmatpush1.msra.mxu0 0.0
    %2082 = vmatprep.subr.mxu0 0.0
    %2083 = vmatpush1.msra.mxu0 0.0
    %2084 = vmatprep.subr.mxu0 0.0
    %2085 = vmatpush1.msra.mxu0 0.0
    %2086 = vmatprep.subr.mxu0 0.0
    %2087 = vmatpush1.msra.mxu0 0.0
    %2088 = vmatprep.subr.mxu0 0.0
    %2089 = vmatpush1.msra.mxu0 0.0
    %2090 = vmatprep.subr.mxu0 0.0
    %2091 = vmatpush1.msra.mxu0 0.0
    %2092 = vmatprep.subr.mxu0 0.0
    %2093 = vmatpush1.msra.mxu0 0.0
    %2094 = vmatprep.subr.mxu0 0.0
    %2095 = vmatpush1.msra.mxu0 0.0
    %2096 = vmatprep.subr.mxu0 0.0
    %2097 = vmatpush1.msra.mxu0 0.0
    %2098 = vmatprep.subr.mxu0 0.0
    %2099 = vmatpush1.msra.mxu0 0.0
    %2100 = vmatprep.subr.mxu0 0.0
    %2101 = vmatpush1.msra.mxu0 0.0
    %2102 = vmatprep.subr.mxu0 0.0
    %2103 = vmatpush1.msra.mxu0 0.0
    %2104 = vmatprep.subr.mxu0 0.0
    %2105 = vmatpush1.msra.mxu0 0.0
    %2106 = vmatprep.subr.mxu0 0.0
    %2107 = vmatpush1.msra.mxu0 0.0
    %2108 = vmatprep.subr.mxu0 0.0
    %2109 = vmatpush1.msra.mxu0 0.0
    %2110 = vmatprep.subr.mxu0 0.0
    %2111 = vmatpush1.msra.mxu0 0.0
    %2112 = vmatprep.subr.mxu0 0.0
    %2113 = vmatpush1.msra.mxu0 0.0
    %2114 = vmatprep.subr.mxu0 0.0
    %2115 = vmatpush1.msra.mxu0 0.0
    %2116 = vmatprep.subr.mxu0 0.0
    %2117 = vmatpush1.msra.mxu0 0.0
    %2118 = vmatprep.subr.mxu0 0.0
    %2119 = vmatpush1.msra.mxu0 0.0
    %2120 = vmatprep.subr.mxu0 0.0
    %2121 = vmatpush1.msra.mxu0 0.0
    %2122 = vmatprep.subr.mxu0 0.0
    %2123 = vmatpush1.msra.mxu0 0.0
    %2124 = vmatprep.subr.mxu0 0.0
    %2125 = vmatpush1.msra.mxu0 0.0
    %2126 = vmatprep.subr.mxu0 0.0
    %2127 = vmatpush1.msra.mxu0 0.0
    %2128 = vmatprep.subr.mxu0 0.0
    %2129 = vmatpush1.msra.mxu0 0.0
    %2130 = vmatprep.subr.mxu0 0.0
    %2131 = vmatpush1.msra.mxu0 0.0
    %2132 = vmatprep.mubr.f32.mxu0 0.0
    %2133 = vmatmul.mubr.f32.gmra.mrb[0].mxu0 %v2066
    %v2134 = vpop.f32.mrb[0].mxu0
    %v2135 = vadd.f32 %v321, %v2134
    %v2136 = vpop.f32.mrb[0].mxu0
    %2137 = vdwg.mxu0
    %s2138 = scalar_lea.vmem %s9, 12
    %2139 = vst.msk [vmem:[%s2138] sm:$0x3] %vm398, %v2135
    %s2140 = scalar_lea.vmem %s0, 14
    %v2141 = vld [vmem:[%s2140] sm:$0x3]
    %2143 = vrot.lane.b32.xlu0 %v2141, 2
    %v2144 = vpop.permute.xlu0 %2143
    %2146 = vrot.lane.b32.xlu0 %v1957, 38
    %v2147 = vpop.permute.xlu0 %2146
    %v2149 = vsel %vm83, %v2135, %v2144
    %v2150 = vsel %vm85, %v2149, %v2147
    %v2152 = vsel %vm93, %v2150, 0
    %2154 = vmatprep.subr.mxu0 0.0
    %2155 = vmatpush1.msra.mxu0 %v46
    %2156 = vmatprep.subr.mxu0 0.0
    %2157 = vmatpush1.msra.mxu0 %v47
    %2158 = vmatprep.subr.mxu0 0.0
    %2159 = vmatpush1.msra.mxu0 %v48
    %2160 = vmatprep.subr.mxu0 0.0
    %2161 = vmatpush1.msra.mxu0 %v49
    %2162 = vmatprep.subr.mxu0 0.0
    %2163 = vmatpush1.msra.mxu0 %v99
    %2164 = vmatprep.subr.mxu0 0.0
    %2165 = vmatpush1.msra.mxu0 0.0
    %2166 = vmatprep.subr.mxu0 0.0
    %2167 = vmatpush1.msra.mxu0 0.0
    %2168 = vmatprep.subr.mxu0 0.0
    %2169 = vmatpush1.msra.mxu0 0.0
    %2170 = vmatprep.subr.mxu0 0.0
    %2171 = vmatpush1.msra.mxu0 0.0
    %2172 = vmatprep.subr.mxu0 0.0
    %2173 = vmatpush1.msra.mxu0 0.0
    %2174 = vmatprep.subr.mxu0 0.0
    %2175 = vmatpush1.msra.mxu0 0.0
    %2176 = vmatprep.subr.mxu0 0.0
    %2177 = vmatpush1.msra.mxu0 0.0
    %2178 = vmatprep.subr.mxu0 0.0
    %2179 = vmatpush1.msra.mxu0 0.0
    %2180 = vmatprep.subr.mxu0 0.0
    %2181 = vmatpush1.msra.mxu0 0.0
    %2182 = vmatprep.subr.mxu0 0.0
    %2183 = vmatpush1.msra.mxu0 0.0
    %2184 = vmatprep.subr.mxu0 0.0
    %2185 = vmatpush1.msra.mxu0 0.0
    %2186 = vmatprep.subr.mxu0 0.0
    %2187 = vmatpush1.msra.mxu0 0.0
    %2188 = vmatprep.subr.mxu0 0.0
    %2189 = vmatpush1.msra.mxu0 0.0
    %2190 = vmatprep.subr.mxu0 0.0
    %2191 = vmatpush1.msra.mxu0 0.0
    %2192 = vmatprep.subr.mxu0 0.0
    %2193 = vmatpush1.msra.mxu0 0.0
    %2194 = vmatprep.subr.mxu0 0.0
    %2195 = vmatpush1.msra.mxu0 0.0
    %2196 = vmatprep.subr.mxu0 0.0
    %2197 = vmatpush1.msra.mxu0 0.0
    %2198 = vmatprep.subr.mxu0 0.0
    %2199 = vmatpush1.msra.mxu0 0.0
    %2200 = vmatprep.subr.mxu0 0.0
    %2201 = vmatpush1.msra.mxu0 0.0
    %2202 = vmatprep.subr.mxu0 0.0
    %2203 = vmatpush1.msra.mxu0 0.0
    %2204 = vmatprep.subr.mxu0 0.0
    %2205 = vmatpush1.msra.mxu0 0.0
    %2206 = vmatprep.subr.mxu0 0.0
    %2207 = vmatpush1.msra.mxu0 0.0
    %2208 = vmatprep.subr.mxu0 0.0
    %2209 = vmatpush1.msra.mxu0 0.0
    %2210 = vmatprep.subr.mxu0 0.0
    %2211 = vmatpush1.msra.mxu0 0.0
    %2212 = vmatprep.subr.mxu0 0.0
    %2213 = vmatpush1.msra.mxu0 0.0
    %2214 = vmatprep.subr.mxu0 0.0
    %2215 = vmatpush1.msra.mxu0 0.0
    %2216 = vmatprep.subr.mxu0 0.0
    %2217 = vmatpush1.msra.mxu0 0.0
    %2218 = vmatprep.mubr.f32.mxu0 0.0
    %2219 = vmatmul.mubr.f32.gmra.mrb[0].mxu0 %v2152
    %v2220 = vpop.f32.mrb[0].mxu0
    %v2221 = vadd.f32 %v91, %v2220
    %v2222 = vpop.f32.mrb[0].mxu0
    %2223 = vdwg.mxu0
    %v2224 = vxor.u32 %v2221, 2147483648
    %v2225 = vmul.f32 %v2224, 1.442695
    %v2226 = vpow.pop %v2225
    %v2227 = vadd.f32 %v2226, 1.0
    %v2228 = vrcp.pop %v2227
    %v2229 = vmul.f32 1.0, %v2228
    %v2230 = vtanh.pop %v2221
    %v2231 = vmul.f32 %v2229, %v1951
    %2233 = vrot.lane.b32.xlu0 %v2230, 64
    %v2234 = vpop.permute.xlu0 %2233
    %v2236 = vmul.f32 %v2229, %v2234
    %2238 = vrot.lane.b32.xlu0 %v2236, 32
    %v2239 = vpop.permute.xlu0 %2238
    %v2241 = vadd.f32 %v2231, %v2239
    %v2242 = vtanh.pop %v2241
    %2244 = vrot.lane.b32.xlu0 %v2242, 64
    %v2245 = vpop.permute.xlu0 %2244
    %v2247 = vmul.f32 %v2229, %v2245
    %2249 = vrot.lane.b32.xlu0 %v2247, 32
    %v2250 = vpop.permute.xlu0 %2249
    %2252 = vrot.lane.b32.xlu0 %v2062, 64
    %v2253 = vpop.permute.xlu0 %2252
    %v2255 = vsel %vm207, %v2250, %v2253
    %v2257 = vsel %vm215, %v2255, 0
    %2259 = vmatprep.subr.mxu0 0.0
    %2260 = vmatpush1.msra.mxu0 %v51
    %2261 = vmatprep.subr.mxu0 0.0
    %2262 = vmatpush1.msra.mxu0 %v52
    %2263 = vmatprep.subr.mxu0 0.0
    %2264 = vmatpush1.msra.mxu0 %v53
    %2265 = vmatprep.subr.mxu0 0.0
    %2266 = vmatpush1.msra.mxu0 %v54
    %2267 = vmatprep.subr.mxu0 0.0
    %2268 = vmatpush1.msra.mxu0 %v55
    %2269 = vmatprep.subr.mxu0 0.0
    %2270 = vmatpush1.msra.mxu0 %v56
    %2271 = vmatprep.subr.mxu0 0.0
    %2272 = vmatpush1.msra.mxu0 %v57
    %2273 = vmatprep.subr.mxu0 0.0
    %2274 = vmatpush1.msra.mxu0 %v58
    %2275 = vmatprep.subr.mxu0 0.0
    %2276 = vmatpush1.msra.mxu0 0.0
    %2277 = vmatprep.subr.mxu0 0.0
    %2278 = vmatpush1.msra.mxu0 0.0
    %2279 = vmatprep.subr.mxu0 0.0
    %2280 = vmatpush1.msra.mxu0 0.0
    %2281 = vmatprep.subr.mxu0 0.0
    %2282 = vmatpush1.msra.mxu0 0.0
    %2283 = vmatprep.subr.mxu0 0.0
    %2284 = vmatpush1.msra.mxu0 0.0
    %2285 = vmatprep.subr.mxu0 0.0
    %2286 = vmatpush1.msra.mxu0 0.0
    %2287 = vmatprep.subr.mxu0 0.0
    %2288 = vmatpush1.msra.mxu0 0.0
    %2289 = vmatprep.subr.mxu0 0.0
    %2290 = vmatpush1.msra.mxu0 0.0
    %2291 = vmatprep.subr.mxu0 0.0
    %2292 = vmatpush1.msra.mxu0 0.0
    %2293 = vmatprep.subr.mxu0 0.0
    %2294 = vmatpush1.msra.mxu0 0.0
    %2295 = vmatprep.subr.mxu0 0.0
    %2296 = vmatpush1.msra.mxu0 0.0
    %2297 = vmatprep.subr.mxu0 0.0
    %2298 = vmatpush1.msra.mxu0 0.0
    %2299 = vmatprep.subr.mxu0 0.0
    %2300 = vmatpush1.msra.mxu0 0.0
    %2301 = vmatprep.subr.mxu0 0.0
    %2302 = vmatpush1.msra.mxu0 0.0
    %2303 = vmatprep.subr.mxu0 0.0
    %2304 = vmatpush1.msra.mxu0 0.0
    %2305 = vmatprep.subr.mxu0 0.0
    %2306 = vmatpush1.msra.mxu0 0.0
    %2307 = vmatprep.subr.mxu0 0.0
    %2308 = vmatpush1.msra.mxu0 0.0
    %2309 = vmatprep.subr.mxu0 0.0
    %2310 = vmatpush1.msra.mxu0 0.0
    %2311 = vmatprep.subr.mxu0 0.0
    %2312 = vmatpush1.msra.mxu0 0.0
    %2313 = vmatprep.subr.mxu0 0.0
    %2314 = vmatpush1.msra.mxu0 0.0
    %2315 = vmatprep.subr.mxu0 0.0
    %2316 = vmatpush1.msra.mxu0 0.0
    %2317 = vmatprep.subr.mxu0 0.0
    %2318 = vmatpush1.msra.mxu0 0.0
    %2319 = vmatprep.subr.mxu0 0.0
    %2320 = vmatpush1.msra.mxu0 0.0
    %2321 = vmatprep.subr.mxu0 0.0
    %2322 = vmatpush1.msra.mxu0 0.0
    %2323 = vmatprep.mubr.f32.mxu0 0.0
    %2324 = vmatmul.mubr.f32.gmra.mrb[0].mxu0 %v2257
    %v2325 = vpop.f32.mrb[0].mxu0
    %v2326 = vadd.f32 %v213, %v2325
    %v2327 = vpop.f32.mrb[0].mxu0
    %2328 = vdwg.mxu0
    %v2329 = vxor.u32 %v2326, 2147483648
    %v2330 = vmul.f32 %v2329, 1.442695
    %v2331 = vpow.pop %v2330
    %v2332 = vadd.f32 %v2331, 1.0
    %v2333 = vrcp.pop %v2332
    %v2334 = vmul.f32 1.0, %v2333
    %v2335 = vtanh.pop %v2326
    %v2336 = vmul.f32 %v2334, %v2056
    %2338 = vrot.lane.b32.xlu0 %v2335, 64
    %v2339 = vpop.permute.xlu0 %2338
    %v2341 = vmul.f32 %v2334, %v2339
    %2343 = vrot.lane.b32.xlu0 %v2341, 32
    %v2344 = vpop.permute.xlu0 %2343
    %v2346 = vadd.f32 %v2336, %v2344
    %v2347 = vtanh.pop %v2346
    %2349 = vrot.lane.b32.xlu0 %v2347, 64
    %v2350 = vpop.permute.xlu0 %2349
    %v2352 = vmul.f32 %v2334, %v2350
    %2354 = vrot.lane.b32.xlu0 %v2352, 32
    %v2355 = vpop.permute.xlu0 %2354
    %v2356 = vsel %vm207, %v2355, 0
    %2358 = vmatprep.subr.mxu0 0.0
    %2359 = vmatpush1.msra.mxu0 %v62
    %2360 = vmatprep.subr.mxu0 0.0
    %2361 = vmatpush1.msra.mxu0 %v63
    %2362 = vmatprep.subr.mxu0 0.0
    %2363 = vmatpush1.msra.mxu0 %v64
    %2364 = vmatprep.subr.mxu0 0.0
    %2365 = vmatpush1.msra.mxu0 %v65
    %2366 = vmatprep.subr.mxu0 0.0
    %2367 = vmatpush1.msra.mxu0 0.0
    %2368 = vmatprep.subr.mxu0 0.0
    %2369 = vmatpush1.msra.mxu0 0.0
    %2370 = vmatprep.subr.mxu0 0.0
    %2371 = vmatpush1.msra.mxu0 0.0
    %2372 = vmatprep.subr.mxu0 0.0
    %2373 = vmatpush1.msra.mxu0 0.0
    %2374 = vmatprep.subr.mxu0 0.0
    %2375 = vmatpush1.msra.mxu0 0.0
    %2376 = vmatprep.subr.mxu0 0.0
    %2377 = vmatpush1.msra.mxu0 0.0
    %2378 = vmatprep.subr.mxu0 0.0
    %2379 = vmatpush1.msra.mxu0 0.0
    %2380 = vmatprep.subr.mxu0 0.0
    %2381 = vmatpush1.msra.mxu0 0.0
    %2382 = vmatprep.subr.mxu0 0.0
    %2383 = vmatpush1.msra.mxu0 0.0
    %2384 = vmatprep.subr.mxu0 0.0
    %2385 = vmatpush1.msra.mxu0 0.0
    %2386 = vmatprep.subr.mxu0 0.0
    %2387 = vmatpush1.msra.mxu0 0.0
    %2388 = vmatprep.subr.mxu0 0.0
    %2389 = vmatpush1.msra.mxu0 0.0
    %2390 = vmatprep.subr.mxu0 0.0
    %2391 = vmatpush1.msra.mxu0 0.0
    %2392 = vmatprep.subr.mxu0 0.0
    %2393 = vmatpush1.msra.mxu0 0.0
    %2394 = vmatprep.subr.mxu0 0.0
    %2395 = vmatpush1.msra.mxu0 0.0
    %2396 = vmatprep.subr.mxu0 0.0
    %2397 = vmatpush1.msra.mxu0 0.0
    %2398 = vmatprep.subr.mxu0 0.0
    %2399 = vmatpush1.msra.mxu0 0.0
    %2400 = vmatprep.subr.mxu0 0.0
    %2401 = vmatpush1.msra.mxu0 0.0
    %2402 = vmatprep.subr.mxu0 0.0
    %2403 = vmatpush1.msra.mxu0 0.0
    %2404 = vmatprep.subr.mxu0 0.0
    %2405 = vmatpush1.msra.mxu0 0.0
    %2406 = vmatprep.subr.mxu0 0.0
    %2407 = vmatpush1.msra.mxu0 0.0
    %2408 = vmatprep.subr.mxu0 0.0
    %2409 = vmatpush1.msra.mxu0 0.0
    %2410 = vmatprep.subr.mxu0 0.0
    %2411 = vmatpush1.msra.mxu0 0.0
    %2412 = vmatprep.subr.mxu0 0.0
    %2413 = vmatpush1.msra.mxu0 0.0
    %2414 = vmatprep.subr.mxu0 0.0
    %2415 = vmatpush1.msra.mxu0 0.0
    %2416 = vmatprep.subr.mxu0 0.0
    %2417 = vmatpush1.msra.mxu0 0.0
    %2418 = vmatprep.subr.mxu0 0.0
    %2419 = vmatpush1.msra.mxu0 0.0
    %2420 = vmatprep.subr.mxu0 0.0
    %2421 = vmatpush1.msra.mxu0 0.0
    %2422 = vmatprep.mubr.f32.mxu0 0.0
    %2423 = vmatmul.mubr.f32.gmra.mrb[0].mxu0 %v2356
    %v2424 = vpop.f32.mrb[0].mxu0
    %v2425 = vadd.f32 %v321, %v2424
    %v2426 = vpop.f32.mrb[0].mxu0
    %2427 = vdwg.mxu0
    %s2428 = scalar_lea.vmem %s9, 14
    %2429 = vst.msk [vmem:[%s2428] sm:$0x3] %vm398, %v2425
    // Predicated region
    $region42: #{tpu_custom_call.1} parent=1 // pred_check
      _
    $region43: #{tpu_custom_call.1} parent=1 // pred_check_branch
      %2431 = sbr.rel (0) target = $region45
    $region44: #{tpu_custom_call.1} parent=1 // pred_region
      _
    $region45: #{tpu_custom_call.1} parent=1 // pred_fallthru
      _
    // Predicated region
    $region46: #{tpu_custom_call.1} parent=1 // pred_check
      _
    $region47: #{tpu_custom_call.1} parent=1 // pred_check_branch
      %2433 = sbr.rel (0) target = $region49
    $region48: #{tpu_custom_call.1} parent=1 // pred_region
      _
    $region49: #{tpu_custom_call.1} parent=1 // pred_fallthru
      _
    %2434 = vsyncpa [#allocation3], 1

</llo_original>
